<compile_context>
chip_gen: v6e
topology: v6e:2x2x1
jax: 0.10.0
libtpu: 0.0.40
codegen_flags: <defaults>
</compile_context>

<pallas_src>
import functools

import jax
import jax.numpy as jnp
import numpy as np
from jax import lax
from jax.experimental import pallas as pl
from jax.experimental.pallas import tpu as pltpu


def _round_up(x: int, m: int) -> int:
    return (x + m - 1) // m * m


def _cdiv(a: int, b: int) -> int:
    return (a + b - 1) // b


# ---------------------------------------------------------------------------
# Generation-aware VMEM budgeting (v5e/v6e: 128 MiB, v7x: 64 MiB per core).
# ---------------------------------------------------------------------------
def _vmem_caps():
    cap = 64 * 1024 * 1024  # safe lower bound = v7x per-TensorCore VMEM
    try:
        info = pltpu.get_tpu_info()
        cap = int(getattr(info, "vmem_capacity_bytes", cap)) or cap
    except Exception:
        pass
    limit = min(int(cap * 0.70), 96 * 1024 * 1024)
    budget = min(int(cap * 0.45), 60 * 1024 * 1024)
    return budget, limit


_VMEM_BUDGET, _VMEM_LIMIT = _vmem_caps()


# ---------------------------------------------------------------------------
# Kernel: fused conv3x3/stride2 (as 6 shifted matmuls) + folded-BN bias + ReLU
# ---------------------------------------------------------------------------
def _down_kernel(xe_ref, xo_ref, xh_ref, wa_ref, wb_ref, b_ref, out_ref, ev_ref,
                 *, toh, owp, cin):
    # xe_ref : (1, toh, owc, 2*cin)  even padded rows (cell rows i*toh ..)
    # xo_ref : (1, toh, owc, 2*cin)  odd  padded rows
    # xh_ref : (1, 1,   owc, 2*cin)  even padded cell-row (i+1)*toh  (halo)
    # wa_ref : (3, 2*cin, tcp)       BN-folded weights, taps kj in {0,1}
    # wb_ref : (3, cin,   tcp)       BN-folded weights, tap  kj = 2
    # b_ref  : (1, tcp) f32          BN-folded bias
    # out_ref: (1, toh, owp, tcp)
    # ev_ref : VMEM scratch (toh, owc, 2*cin): even rows shifted down one cell.

    # Assemble the "next even row" slab: rows 1..toh-1 of this block + halo.
    ev_ref[0:toh - 1] = xe_ref[0, 1:toh]
    ev_ref[toh - 1:toh] = xh_ref[0]

    def tap(lhs3d, w2d):
        t, w, k = lhs3d.shape
        return jnp.dot(lhs3d.reshape(t * w, k), w2d,
                       preferred_element_type=jnp.float32)

    acc = tap(xe_ref[0, :, 0:owp, :], wa_ref[0])               # ki=0, kj in {0,1}
    acc += tap(xe_ref[0, :, 1:owp + 1, 0:cin], wb_ref[0])      # ki=0, kj=2
    acc += tap(xo_ref[0, :, 0:owp, :], wa_ref[1])              # ki=1, kj in {0,1}
    acc += tap(xo_ref[0, :, 1:owp + 1, 0:cin], wb_ref[1])      # ki=1, kj=2
    acc += tap(ev_ref[:, 0:owp, :], wa_ref[2])                 # ki=2, kj in {0,1}
    acc += tap(ev_ref[:, 1:owp + 1, 0:cin], wb_ref[2])         # ki=2, kj=2

    y = jnp.maximum(acc + b_ref[...], 0.0)                     # bias + ReLU (f32)
    tcp = out_ref.shape[3]
    out_ref[...] = y.reshape(1, toh, owp, tcp).astype(out_ref.dtype)


# ---------------------------------------------------------------------------
# Tile sizing: resident-weight Cout tile + largest row tile fitting the budget
# ---------------------------------------------------------------------------
def _pick_tiles(N, OH, OW_pad, OWC, Cin, CP, in_bytes, out_bytes):
    c2 = 2 * Cin
    budget = _VMEM_BUDGET

    def w_bytes(tcp):
        wa = 3 * _round_up(c2, 8) * tcp * in_bytes
        wb = 3 * _round_up(Cin, 8) * tcp * in_bytes
        bias = 8 * tcp * 4
        return 2 * (wa + wb + bias)            # conservative double-buffer est.

    tcp = 128
    for cand in range(CP, 127, -128):          # largest Cout tile that divides CP
        if CP % cand == 0 and w_bytes(cand) <= budget // 3:
            tcp = cand
            break

    lane_x = _round_up(c2, 128)                # narrow channels pad to full lanes
    sub_w = _round_up(OWC, 8)
    sub_o = _round_up(OW_pad, 8)

    def usage(toh):
        xblk = toh * sub_w * lane_x * in_bytes         # one even/odd input block
        halo = sub_w * lane_x * in_bytes
        outb = toh * sub_o * tcp * out_bytes
        accb = toh * sub_o * tcp * 4                   # f32 accumulator value
        lhsb = toh * sub_o * lane_x * in_bytes         # sliced-LHS temporaries
        return (2 * (2 * xblk + halo + outb) + w_bytes(tcp)
                + xblk + 2 * accb + 2 * lhsb)

    toh = 8
    for cand in (512, 256, 128, 64, 32, 16, 8):
        if cand > _round_up(OH, 8):
            continue
        if usage(cand) <= budget:
            toh = cand
            break

    # Avoid gross row over-padding; keep >= 2 parallel steps for v7x megacore.
    while toh > 8 and _round_up(OH, toh) > max(OH + 4, int(OH * 1.25)):
        toh //= 2
    while toh > 8 and N * _cdiv(OH, toh) < 2:
        toh //= 2
    return toh, tcp


# ---------------------------------------------------------------------------
# NHWC core (no layout plumbing):  conv3x3/s2 + BN(inference) + ReLU
# ---------------------------------------------------------------------------
def _down_core_nhwc(x_nhwc, weight, gamma, beta, running_mean, running_var,
                    eps, compute_dtype):
    N, H, W, Cin = x_nhwc.shape
    Cout = weight.shape[0]
    OH = (H - 1) // 2 + 1
    OW = (W - 1) // 2 + 1

    in_dtype = jnp.dtype(compute_dtype)
    out_dtype = in_dtype                      # emit in compute/consumer dtype
    sub = 16 if in_dtype.itemsize < 4 else 8
    OW_pad = _round_up(OW, sub)               # layout-friendly column count
    OWC = OW_pad + 1                          # cells per row after width s2d
    CP = _round_up(Cout, 128)                 # lane-dense output channels

    toh, tcp = _pick_tiles(N, OH, OW_pad, OWC, Cin, CP,
                           in_dtype.itemsize, jnp.dtype(out_dtype).itemsize)
    OH_pad = _round_up(OH, toh)
    nt = OH_pad // toh
    nco = CP // tcp

    # ---- fold BatchNorm (inference) into conv weights / bias -------------
    inv_std = lax.rsqrt(running_var.astype(jnp.float32) + eps)
    scale = gamma.astype(jnp.float32) * inv_std                       # (Cout,)
    bias = beta.astype(jnp.float32) - running_mean.astype(jnp.float32) * scale
    w_t = jnp.transpose(weight, (2, 3, 1, 0)).astype(jnp.float32) * scale
    wa = w_t[:, 0:2].reshape(3, 2 * Cin, Cout)                        # kj in {0,1}
    wb = w_t[:, 2]                                                    # kj = 2
    wa = jnp.pad(wa, ((0, 0), (0, 0), (0, CP - Cout))).astype(in_dtype)
    wb = jnp.pad(wb, ((0, 0), (0, 0), (0, CP - Cout))).astype(in_dtype)
    bias_p = jnp.pad(bias, (0, CP - Cout)).reshape(1, CP)             # f32

    # ---- pad + width space-to-depth (free reshape) + even/odd row split ---
    pb = 2 * OH_pad - H                       # bottom zero rows
    pr = 2 * OWC - 1 - W                      # right zero cols
    xp = jnp.pad(x_nhwc.astype(in_dtype), ((0, 0), (1, pb), (1, pr), (0, 0)))
    xp = xp.reshape(N, 2 * OH_pad + 1, OWC, 2 * Cin)
    x_even = xp[:, 0::2]                      # (N, OH_pad + 1, OWC, 2*Cin)
    x_odd = xp[:, 1::2]                       # (N, OH_pad,     OWC, 2*Cin)

    c2 = 2 * Cin
    kernel = functools.partial(_down_kernel, toh=toh, owp=OW_pad, cin=Cin)

    out_p = pl.pallas_call(
        kernel,
        out_shape=jax.ShapeDtypeStruct((N, OH_pad, OW_pad, CP), out_dtype),
        grid_spec=pltpu.PrefetchScalarGridSpec(
            num_scalar_prefetch=0,
            grid=(N, nco, nt),
            in_specs=[
                pl.BlockSpec((1, toh, OWC, c2), lambda b, j, i: (b, i, 0, 0)),
                pl.BlockSpec((1, toh, OWC, c2), lambda b, j, i: (b, i, 0, 0)),
                pl.BlockSpec((1, 1, OWC, c2),
                             lambda b, j, i: (b, (i + 1) * toh, 0, 0)),
                pl.BlockSpec((3, c2, tcp), lambda b, j, i: (0, 0, j)),
                pl.BlockSpec((3, Cin, tcp), lambda b, j, i: (0, 0, j)),
                pl.BlockSpec((1, tcp), lambda b, j, i: (0, j)),
            ],
            out_specs=pl.BlockSpec((1, toh, OW_pad, tcp),
                                   lambda b, j, i: (b, i, 0, j)),
            scratch_shapes=[pltpu.VMEM((toh, OWC, c2), in_dtype)],
        ),
        compiler_params=pltpu.CompilerParams(
            dimension_semantics=("parallel", "parallel", "parallel"),
            vmem_limit_bytes=_VMEM_LIMIT,
        ),
    )(x_even, x_odd, x_even, wa, wb, bias_p)

    return out_p[:, :OH, :OW, :Cout].astype(x_nhwc.dtype)


# ---------------------------------------------------------------------------
# NCHW entry point (PyTorch layout parity)
# ---------------------------------------------------------------------------
@functools.partial(
    jax.jit, static_argnames=("eps", "compute_dtype", "training", "dropout_p"))
def down_forward(x_nchw, weight, gamma, beta, running_mean, running_var,
                 dropout_key=None, *, eps=1e-5, compute_dtype=jnp.float32,
                 training=False, dropout_p=0.5):
    """Down.forward: conv3x3/s2 (no bias) -> BN(running stats) -> ReLU -> Dropout."""
    x_nhwc = jnp.transpose(x_nchw, (0, 2, 3, 1))
    out = _down_core_nhwc(x_nhwc, weight, gamma, beta, running_mean, running_var,
                          eps, compute_dtype)
    if training and dropout_p > 0.0:
        if dropout_key is None:
            raise ValueError("training=True dropout requires dropout_key")
        keep = jax.random.bernoulli(dropout_key, 1.0 - dropout_p, out.shape)
        out = jnp.where(keep, out / (1.0 - dropout_p), 0.0).astype(out.dtype)
    return jnp.transpose(out, (0, 3, 1, 2))


# ---------------------------------------------------------------------------
# Pure-JAX reference (XLA conv) for verification
# ---------------------------------------------------------------------------
def down_reference(x_nchw, weight, gamma, beta, running_mean, running_var,
                   eps=1e-5):
    conv = lax.conv_general_dilated(
        x_nchw.astype(jnp.float32), weight.astype(jnp.float32),
        window_strides=(2, 2), padding=((1, 1), (1, 1)),
        dimension_numbers=("NCHW", "OIHW", "NCHW"))
    inv = 1.0 / jnp.sqrt(running_var + eps)
    scale = (gamma * inv).reshape(1, -1, 1, 1)
    bias = (beta - running_mean * gamma * inv).reshape(1, -1, 1, 1)
    return jnp.maximum(conv * scale + bias, 0.0)


if __name__ == "__main__":
    key = jax.random.PRNGKey(0)
    k_x, k_w, k_g, k_b, k_m, k_v, k_x2, k_w2 = jax.random.split(key, 8)

    # Case 1: canonical small shape, f32 compute path (tight tolerance).
    N, Cin, H, W, Cout = 2, 4, 16, 16, 8
    x = jax.random.normal(k_x, (N, Cin, H, W), dtype=jnp.float32)
    weight = jax.random.normal(k_w, (Cout, Cin, 3, 3), dtype=jnp.float32) * 0.1
    gamma = 1.0 + 0.1 * jax.random.normal(k_g, (Cout,), dtype=jnp.float32)
    beta = 0.1 * jax.random.normal(k_b, (Cout,), dtype=jnp.float32)
    mean = 0.1 * jax.random.normal(k_m, (Cout,), dtype=jnp.float32)
    var = jnp.abs(1.0 + 0.1 * jax.random.normal(k_v, (Cout,), dtype=jnp.float32))

    out = jax.block_until_ready(down_forward(x, weight, gamma, beta, mean, var))
    ref = down_reference(x, weight, gamma, beta, mean, var)
    assert out.shape == (N, Cout, H // 2, W // 2)
    np.testing.assert_allclose(np.asarray(out), np.asarray(ref),
                               rtol=1e-4, atol=1e-4)

    # Case 2: odd spatial dims + non-128 Cout exercise every padding path.
    N2, Ci2, H2, W2, Co2 = 1, 3, 15, 17, 5
    x2 = jax.random.normal(k_x2, (N2, Ci2, H2, W2), dtype=jnp.float32)
    w2 = jax.random.normal(k_w2, (Co2, Ci2, 3, 3), dtype=jnp.float32) * 0.1
    g2 = jnp.ones((Co2,), jnp.float32)
    b2 = jnp.zeros((Co2,), jnp.float32)
    m2 = jnp.zeros((Co2,), jnp.float32)
    v2 = jnp.ones((Co2,), jnp.float32)
    out2 = jax.block_until_ready(down_forward(x2, w2, g2, b2, m2, v2))
    ref2 = down_reference(x2, w2, g2, b2, m2, v2)
    assert out2.shape == (N2, Co2, (H2 + 1) // 2, (W2 + 1) // 2)
    np.testing.assert_allclose(np.asarray(out2), np.asarray(ref2),
                               rtol=1e-4, atol=1e-4)

    # Case 3: bf16 fast path (memory-bound v6e/v7x regime), looser tolerance.
    out_bf16 = jax.block_until_ready(
        down_forward(x, weight, gamma, beta, mean, var,
                     compute_dtype=jnp.bfloat16))
    np.testing.assert_allclose(np.asarray(out_bf16, dtype=np.float32),
                               np.asarray(ref), rtol=5e-2, atol=5e-2)

    print("KERNEL_OK")
</pallas_src>

<mosaic_0001>
module attributes {stable_mosaic.version = 11 : i64} {
  func.func @_down_kernel(%arg0: i32, %arg1: i32, %arg2: i32, %arg3: memref<1x8x9x8xf32, #tpu.memory_space<vmem>>, %arg4: memref<1x8x9x8xf32, #tpu.memory_space<vmem>>, %arg5: memref<1x1x9x8xf32, #tpu.memory_space<vmem>>, %arg6: memref<3x8x128xf32, #tpu.memory_space<vmem>>, %arg7: memref<3x4x128xf32, #tpu.memory_space<vmem>>, %arg8: memref<1x128xf32, #tpu.memory_space<vmem>>, %arg9: memref<1x8x8x128xf32, #tpu.memory_space<vmem>>, %arg10: memref<8x9x8xf32, #tpu.memory_space<vmem>>) attributes {dimension_semantics = [#tpu.dimension_semantics<parallel>, #tpu.dimension_semantics<parallel>, #tpu.dimension_semantics<parallel>], iteration_bounds = array<i64: 2, 1, 1>, scalar_prefetch = 0 : i64, scratch_operands = 1 : i64, tpu.core_type = #tpu.core_type<tc>, window_params = [{transform_indices = @transform_0, window_bounds = array<i64: 1, 8, 9, 8>}, {transform_indices = @transform_1, window_bounds = array<i64: 1, 8, 9, 8>}, {transform_indices = @transform_2, window_bounds = array<i64: 1, 1, 9, 8>}, {transform_indices = @transform_3, window_bounds = array<i64: 3, 8, 128>}, {transform_indices = @transform_4, window_bounds = array<i64: 3, 4, 128>}, {transform_indices = @transform_5, window_bounds = array<i64: 1, 128>}, {transform_indices = @transform_6, window_bounds = array<i64: 1, 8, 8, 128>}]} {
    %c0 = arith.constant 0 : index
    %c1 = arith.constant 1 : index
    %c0_0 = arith.constant 0 : index
    %c0_1 = arith.constant 0 : index
    %0 = vector.load %arg3[%c0, %c1, %c0_0, %c0_1] : memref<1x8x9x8xf32, #tpu.memory_space<vmem>>, vector<1x7x9x8xf32>
    %1 = vector.shape_cast %0 : vector<1x7x9x8xf32> to vector<7x9x8xf32>
    %c0_2 = arith.constant 0 : index
    %c0_3 = arith.constant 0 : index
    %c0_4 = arith.constant 0 : index
    %2 = vector.load %arg10[%c0_2, %c0_3, %c0_4] : memref<8x9x8xf32, #tpu.memory_space<vmem>>, vector<7x9x8xf32>
    tpu.vector_store %arg10[%c0_2, %c0_3, %c0_4], %1 {strides = array<i32>} : memref<8x9x8xf32, #tpu.memory_space<vmem>>, vector<7x9x8xf32>,
    %c0_5 = arith.constant 0 : index
    %c0_6 = arith.constant 0 : index
    %c0_7 = arith.constant 0 : index
    %c0_8 = arith.constant 0 : index
    %3 = vector.load %arg5[%c0_5, %c0_6, %c0_7, %c0_8] : memref<1x1x9x8xf32, #tpu.memory_space<vmem>>, vector<1x1x9x8xf32>
    %4 = vector.shape_cast %3 : vector<1x1x9x8xf32> to vector<1x9x8xf32>
    %c7 = arith.constant 7 : index
    %c0_9 = arith.constant 0 : index
    %c0_10 = arith.constant 0 : index
    %5 = vector.load %arg10[%c7, %c0_9, %c0_10] : memref<8x9x8xf32, #tpu.memory_space<vmem>>, vector<1x9x8xf32>
    tpu.vector_store %arg10[%c7, %c0_9, %c0_10], %4 {strides = array<i32>} : memref<8x9x8xf32, #tpu.memory_space<vmem>>, vector<1x9x8xf32>,
    %c0_11 = arith.constant 0 : index
    %c0_12 = arith.constant 0 : index
    %c0_13 = arith.constant 0 : index
    %c0_14 = arith.constant 0 : index
    %6 = vector.load %arg3[%c0_11, %c0_12, %c0_13, %c0_14] : memref<1x8x9x8xf32, #tpu.memory_space<vmem>>, vector<1x8x8x8xf32>
    %7 = vector.shape_cast %6 : vector<1x8x8x8xf32> to vector<8x8x8xf32>
    %c0_15 = arith.constant 0 : index
    %c0_16 = arith.constant 0 : index
    %c0_17 = arith.constant 0 : index
    %8 = vector.load %arg6[%c0_15, %c0_16, %c0_17] : memref<3x8x128xf32, #tpu.memory_space<vmem>>, vector<1x8x128xf32>
    %9 = vector.shape_cast %8 : vector<1x8x128xf32> to vector<8x128xf32>
    %10 = vector.shape_cast %7 : vector<8x8x8xf32> to vector<64x8xf32>
    %cst = arith.constant dense<0.000000e+00> : vector<64x128xf32>
    %11 = tpu.matmul %10, %9, %cst {dimension_numbers = #tpu.dot_dimension_numbers<[1], [0], [0], [1], [0, 0, 1, 1], [], []>} : vector<64x8xf32>, vector<8x128xf32>, vector<64x128xf32> -> vector<64x128xf32>
    %c0_18 = arith.constant 0 : index
    %c0_19 = arith.constant 0 : index
    %c1_20 = arith.constant 1 : index
    %c0_21 = arith.constant 0 : index
    %12 = vector.load %arg3[%c0_18, %c0_19, %c1_20, %c0_21] : memref<1x8x9x8xf32, #tpu.memory_space<vmem>>, vector<1x8x8x4xf32>
    %13 = vector.shape_cast %12 : vector<1x8x8x4xf32> to vector<8x8x4xf32>
    %c0_22 = arith.constant 0 : index
    %c0_23 = arith.constant 0 : index
    %c0_24 = arith.constant 0 : index
    %14 = vector.load %arg7[%c0_22, %c0_23, %c0_24] : memref<3x4x128xf32, #tpu.memory_space<vmem>>, vector<1x4x128xf32>
    %15 = vector.shape_cast %14 : vector<1x4x128xf32> to vector<4x128xf32>
    %16 = vector.shape_cast %13 : vector<8x8x4xf32> to vector<64x4xf32>
    %cst_25 = arith.constant dense<0.000000e+00> : vector<64x128xf32>
    %17 = tpu.matmul %16, %15, %cst_25 {dimension_numbers = #tpu.dot_dimension_numbers<[1], [0], [0], [1], [0, 0, 1, 1], [], []>} : vector<64x4xf32>, vector<4x128xf32>, vector<64x128xf32> -> vector<64x128xf32>
    %18 = arith.addf %11, %17 : vector<64x128xf32>
    %c0_26 = arith.constant 0 : index
    %c0_27 = arith.constant 0 : index
    %c0_28 = arith.constant 0 : index
    %c0_29 = arith.constant 0 : index
    %19 = vector.load %arg4[%c0_26, %c0_27, %c0_28, %c0_29] : memref<1x8x9x8xf32, #tpu.memory_space<vmem>>, vector<1x8x8x8xf32>
    %20 = vector.shape_cast %19 : vector<1x8x8x8xf32> to vector<8x8x8xf32>
    %c1_30 = arith.constant 1 : index
    %c0_31 = arith.constant 0 : index
    %c0_32 = arith.constant 0 : index
    %21 = vector.load %arg6[%c1_30, %c0_31, %c0_32] : memref<3x8x128xf32, #tpu.memory_space<vmem>>, vector<1x8x128xf32>
    %22 = vector.shape_cast %21 : vector<1x8x128xf32> to vector<8x128xf32>
    %23 = vector.shape_cast %20 : vector<8x8x8xf32> to vector<64x8xf32>
    %cst_33 = arith.constant dense<0.000000e+00> : vector<64x128xf32>
    %24 = tpu.matmul %23, %22, %cst_33 {dimension_numbers = #tpu.dot_dimension_numbers<[1], [0], [0], [1], [0, 0, 1, 1], [], []>} : vector<64x8xf32>, vector<8x128xf32>, vector<64x128xf32> -> vector<64x128xf32>
    %25 = arith.addf %18, %24 : vector<64x128xf32>
    %c0_34 = arith.constant 0 : index
    %c0_35 = arith.constant 0 : index
    %c1_36 = arith.constant 1 : index
    %c0_37 = arith.constant 0 : index
    %26 = vector.load %arg4[%c0_34, %c0_35, %c1_36, %c0_37] : memref<1x8x9x8xf32, #tpu.memory_space<vmem>>, vector<1x8x8x4xf32>
    %27 = vector.shape_cast %26 : vector<1x8x8x4xf32> to vector<8x8x4xf32>
    %c1_38 = arith.constant 1 : index
    %c0_39 = arith.constant 0 : index
    %c0_40 = arith.constant 0 : index
    %28 = vector.load %arg7[%c1_38, %c0_39, %c0_40] : memref<3x4x128xf32, #tpu.memory_space<vmem>>, vector<1x4x128xf32>
    %29 = vector.shape_cast %28 : vector<1x4x128xf32> to vector<4x128xf32>
    %30 = vector.shape_cast %27 : vector<8x8x4xf32> to vector<64x4xf32>
    %cst_41 = arith.constant dense<0.000000e+00> : vector<64x128xf32>
    %31 = tpu.matmul %30, %29, %cst_41 {dimension_numbers = #tpu.dot_dimension_numbers<[1], [0], [0], [1], [0, 0, 1, 1], [], []>} : vector<64x4xf32>, vector<4x128xf32>, vector<64x128xf32> -> vector<64x128xf32>
    %32 = arith.addf %25, %31 : vector<64x128xf32>
    %c0_42 = arith.constant 0 : index
    %c0_43 = arith.constant 0 : index
    %c0_44 = arith.constant 0 : index
    %33 = vector.load %arg10[%c0_42, %c0_43, %c0_44] : memref<8x9x8xf32, #tpu.memory_space<vmem>>, vector<8x8x8xf32>
    %c2 = arith.constant 2 : index
    %c0_45 = arith.constant 0 : index
    %c0_46 = arith.constant 0 : index
    %34 = vector.load %arg6[%c2, %c0_45, %c0_46] : memref<3x8x128xf32, #tpu.memory_space<vmem>>, vector<1x8x128xf32>
    %35 = vector.shape_cast %34 : vector<1x8x128xf32> to vector<8x128xf32>
    %36 = vector.shape_cast %33 : vector<8x8x8xf32> to vector<64x8xf32>
    %cst_47 = arith.constant dense<0.000000e+00> : vector<64x128xf32>
    %37 = tpu.matmul %36, %35, %cst_47 {dimension_numbers = #tpu.dot_dimension_numbers<[1], [0], [0], [1], [0, 0, 1, 1], [], []>} : vector<64x8xf32>, vector<8x128xf32>, vector<64x128xf32> -> vector<64x128xf32>
    %38 = arith.addf %32, %37 : vector<64x128xf32>
    %c0_48 = arith.constant 0 : index
    %c1_49 = arith.constant 1 : index
    %c0_50 = arith.constant 0 : index
    %39 = vector.load %arg10[%c0_48, %c1_49, %c0_50] : memref<8x9x8xf32, #tpu.memory_space<vmem>>, vector<8x8x4xf32>
    %c2_51 = arith.constant 2 : index
    %c0_52 = arith.constant 0 : index
    %c0_53 = arith.constant 0 : index
    %40 = vector.load %arg7[%c2_51, %c0_52, %c0_53] : memref<3x4x128xf32, #tpu.memory_space<vmem>>, vector<1x4x128xf32>
    %41 = vector.shape_cast %40 : vector<1x4x128xf32> to vector<4x128xf32>
    %42 = vector.shape_cast %39 : vector<8x8x4xf32> to vector<64x4xf32>
    %cst_54 = arith.constant dense<0.000000e+00> : vector<64x128xf32>
    %43 = tpu.matmul %42, %41, %cst_54 {dimension_numbers = #tpu.dot_dimension_numbers<[1], [0], [0], [1], [0, 0, 1, 1], [], []>} : vector<64x4xf32>, vector<4x128xf32>, vector<64x128xf32> -> vector<64x128xf32>
    %44 = arith.addf %38, %43 : vector<64x128xf32>
    %c0_55 = arith.constant 0 : index
    %c0_56 = arith.constant 0 : index
    %45 = vector.load %arg8[%c0_55, %c0_56] : memref<1x128xf32, #tpu.memory_space<vmem>>, vector<1x128xf32>
    %46 = vector.broadcast %45 : vector<1x128xf32> to vector<64x128xf32>
    %47 = arith.addf %44, %46 : vector<64x128xf32>
    %cst_57 = arith.constant 0.000000e+00 : f32
    %48 = vector.broadcast %cst_57 : f32 to vector<64x128xf32>
    %49 = arith.maximumf %47, %48 : vector<64x128xf32>
    %50 = vector.shape_cast %49 : vector<64x128xf32> to vector<1x8x8x128xf32>
    %c0_58 = arith.constant 0 : index
    %c0_59 = arith.constant 0 : index
    %c0_60 = arith.constant 0 : index
    %c0_61 = arith.constant 0 : index
    %51 = vector.load %arg9[%c0_58, %c0_59, %c0_60, %c0_61] : memref<1x8x8x128xf32, #tpu.memory_space<vmem>>, vector<1x8x8x128xf32>
    tpu.vector_store %arg9[%c0_58, %c0_59, %c0_60, %c0_61], %50 {strides = array<i32>} : memref<1x8x8x128xf32, #tpu.memory_space<vmem>>, vector<1x8x8x128xf32>,
    return
  }
  func.func @transform_0(%arg0: i32, %arg1: i32, %arg2: i32) -> (i32, i32, i32, i32) {
    %c0_i32 = arith.constant 0 : i32
    %c0_i32_0 = arith.constant 0 : i32
    %c0_i32_1 = arith.constant 0 : i32
    return %arg0, %arg2, %c0_i32, %c0_i32_0 : i32, i32, i32, i32
  }
  func.func @transform_1(%arg0: i32, %arg1: i32, %arg2: i32) -> (i32, i32, i32, i32) {
    %c0_i32 = arith.constant 0 : i32
    %c0_i32_0 = arith.constant 0 : i32
    %c0_i32_1 = arith.constant 0 : i32
    return %arg0, %arg2, %c0_i32, %c0_i32_0 : i32, i32, i32, i32
  }
  func.func @transform_2(%arg0: i32, %arg1: i32, %arg2: i32) -> (i32, i32, i32, i32) {
    %c1_i32 = arith.constant 1 : i32
    %0 = arith.addi %arg2, %c1_i32 : i32
    %c8_i32 = arith.constant 8 : i32
    %1 = arith.muli %0, %c8_i32 : i32
    %c0_i32 = arith.constant 0 : i32
    %c0_i32_0 = arith.constant 0 : i32
    %c0_i32_1 = arith.constant 0 : i32
    return %arg0, %1, %c0_i32, %c0_i32_0 : i32, i32, i32, i32
  }
  func.func @transform_3(%arg0: i32, %arg1: i32, %arg2: i32) -> (i32, i32, i32) {
    %c0_i32 = arith.constant 0 : i32
    %c0_i32_0 = arith.constant 0 : i32
    %c0_i32_1 = arith.constant 0 : i32
    return %c0_i32, %c0_i32_0, %arg1 : i32, i32, i32
  }
  func.func @transform_4(%arg0: i32, %arg1: i32, %arg2: i32) -> (i32, i32, i32) {
    %c0_i32 = arith.constant 0 : i32
    %c0_i32_0 = arith.constant 0 : i32
    %c0_i32_1 = arith.constant 0 : i32
    return %c0_i32, %c0_i32_0, %arg1 : i32, i32, i32
  }
  func.func @transform_5(%arg0: i32, %arg1: i32, %arg2: i32) -> (i32, i32) {
    %c0_i32 = arith.constant 0 : i32
    %c0_i32_0 = arith.constant 0 : i32
    return %c0_i32, %arg1 : i32, i32
  }
  func.func @transform_6(%arg0: i32, %arg1: i32, %arg2: i32) -> (i32, i32, i32, i32) {
    %c0_i32 = arith.constant 0 : i32
    %c0_i32_0 = arith.constant 0 : i32
    return %arg0, %arg2, %c0_i32, %arg1 : i32, i32, i32, i32
  }
}

</mosaic_0001>

<llo_original>
// kernel: down_forward.1
$region0: #{down_forward.1}
  #allocation0 [shape = 'u32[]', space=smem, size = 0x4, offset = 0x4, fixed_abs, tag = 'smem constant byte address 0x4 - core index']
  #allocation1 [shape = 'u32[144,128]{1,0:T(1,128)}', space=vmem, size = 0x12000, scoped, tag = 'internal scratch']
  #allocation2 [shape = 'f32[8,9,8]{2,1,0:T(8,128)}', space=vmem, size = 0x10000, scoped, tag = 'scratch operand']
  %s0 = inlined_call_operand.vmem [shape: f32[2,9,9,8], index: 0, kind: input, shape index: {}, may-alias: {0,2}]
  %s1 = inlined_call_operand.vmem [shape: f32[2,8,9,8], index: 1, kind: input, shape index: {}]
  %s2 = inlined_call_operand.vmem [shape: f32[2,9,9,8], index: 2, kind: input, shape index: {}, may-alias: {0,2}]
  %s3 = inlined_call_operand.vmem [shape: f32[3,8,128], index: 3, kind: input, shape index: {}]
  %s4 = inlined_call_operand.vmem [shape: f32[3,4,128], index: 4, kind: input, shape index: {}]
  %s5 = inlined_call_operand.vmem [shape: f32[1,128], index: 5, kind: input, shape index: {}]
  %s6 = inlined_call_operand.vmem [shape: f32[2,8,8,128], index: 6, kind: output, shape index: {}]
  %s7 = sld [smem:[#allocation0]]
  $region57: #{down_forward.1} parent=0
    _
  %s9 = ssub.s32 1, %s7
  %s10 = scalar_select 0, %s9, %s7
  loop: start=0, step=1, limit=4
  $region2: #{down_forward.1} parent=0 // loop_pre_header
    _
  $region3: #{down_forward.1} parent=0 // loop_header
    %s12 = sphi 0, %s16
    %p13 = scmp.ge.s32.totalorder %s12, 4
    %s19 = sphi 0, %s38
    %s20 = sphi 0, %s34
    %s21 = sphi 0, %s30
    %s22 = sphi 0, %s19
    %s23 = sphi 0, %s20
    %s24 = sphi 0, %s21
    %s25 = sphi 0, %s22
    %s26 = sphi 0, %s23
    %s27 = sphi 0, %s24
    %s43 = sphi 0, %s45
    %s46 = sphi 0, %s43
    %s47 = sphi 0, %s46
    %s63 = sphi 0, %s47
    %s71 = sphi 0, %s73
    %s74 = sphi 0, %s71
    %s75 = sphi 0, %s74
    %s91 = sphi 0, %s75
    %s103 = sphi 0, %s105
    %s106 = sphi 0, %s103
    %s107 = sphi 0, %s106
    %s123 = sphi 0, %s107
    %s129 = sphi 0, %s131
    %s132 = sphi 0, %s129
    %s133 = sphi 0, %s132
    %s149 = sphi 0, %s133
    %s155 = sphi 0, %s157
    %s158 = sphi 0, %s155
    %s159 = sphi 0, %s158
    %s175 = sphi 0, %s159
    %s181 = sphi 0, %s183
    %s184 = sphi 0, %s181
    %s185 = sphi 0, %s184
    %s201 = sphi 0, %s185
    %s211 = sphi 0, %s213
    %s214 = sphi 0, %s211
    %s215 = sphi 0, %s214
    %s231 = sphi 0, %s215
  $region4: #{down_forward.1} parent=0 // loop_header_branch
    %15 = sbr.rel (%p13) target = $region8
  $region5: #{down_forward.1} parent=0 // loop_body
    %s17 = ssub.s32 %s12, 1
    %s18 = ssub.s32 %s12, 2
    %s28 = sadd.s32 1, %s21
    %p29 = scmp.ge.s32.totalorder %s28, 1
    %s30 = scalar_select %p29, 0, %s28
    %s31 = sadd.s32 1, %s20
    %s32 = scalar_select %p29, %s31, %s20
    %p33 = scmp.ge.s32.totalorder %s32, 1
    %s34 = scalar_select %p33, 0, %s32
    %s35 = sadd.s32 1, %s19
    %s36 = scalar_select %p33, %s35, %s19
    %p37 = scmp.ge.s32.totalorder %s36, 2
    %s38 = scalar_select %p37, 0, %s36
    %s39 = ssub.s32 %s19, %s38
    %s40 = ssub.s32 %s21, %s30
    %s41 = sor.u32 %s39, %s40
    %p42 = scmp.eq.s32.totalorder %s41, 0
    %s44 = sadd.s32 %s43, 1
    %s45 = scalar_select %p42, %s43, %s44
    %p48 = pneg %p42
    %p49 = scmp.eq.s32.totalorder %s12, 1
    %p50 = por %p48, %p49
    %p51 = scmp.ne.s32.totalorder %s43, %s46
    %p52 = scmp.eq.s32.totalorder %s12, 0
    %p53 = por %p51, %p52
    %p54 = scmp.ne.s32.totalorder %s43, %s46
    %p55 = scmp.eq.s32.totalorder %s17, 1
    %p56 = por %p54, %p55
    %p57 = scmp.ne.s32.totalorder %s46, %s47
    %p58 = scmp.eq.s32.totalorder %s17, 0
    %p59 = por %p57, %p58
    %p60 = scmp.ne.s32.totalorder %s46, %s47
    %p61 = scmp.eq.s32.totalorder %s18, 1
    %p62 = por %p60, %p61
    %p64 = scmp.ne.s32.totalorder %s47, %s63
    %p65 = scmp.eq.s32.totalorder %s18, 0
    %p66 = por %p64, %p65
    %s67 = ssub.s32 %s19, %s38
    %s68 = ssub.s32 %s21, %s30
    %s69 = sor.u32 %s67, %s68
    %p70 = scmp.eq.s32.totalorder %s69, 0
    %s72 = sadd.s32 %s71, 1
    %s73 = scalar_select %p70, %s71, %s72
    %p76 = pneg %p70
    %p77 = scmp.eq.s32.totalorder %s12, 1
    %p78 = por %p76, %p77
    %p79 = scmp.ne.s32.totalorder %s71, %s74
    %p80 = scmp.eq.s32.totalorder %s12, 0
    %p81 = por %p79, %p80
    %p82 = scmp.ne.s32.totalorder %s71, %s74
    %p83 = scmp.eq.s32.totalorder %s17, 1
    %p84 = por %p82, %p83
    %p85 = scmp.ne.s32.totalorder %s74, %s75
    %p86 = scmp.eq.s32.totalorder %s17, 0
    %p87 = por %p85, %p86
    %p88 = scmp.ne.s32.totalorder %s74, %s75
    %p89 = scmp.eq.s32.totalorder %s18, 1
    %p90 = por %p88, %p89
    %p92 = scmp.ne.s32.totalorder %s75, %s91
    %p93 = scmp.eq.s32.totalorder %s18, 0
    %p94 = por %p92, %p93
    %s95 = sadd.s32 %s21, 1
    %s96 = smul.u32 %s95, 8
    %s97 = sadd.s32 %s30, 1
    %s98 = smul.u32 %s97, 8
    %s99 = ssub.s32 %s19, %s38
    %s100 = ssub.s32 %s96, %s98
    %s101 = sor.u32 %s99, %s100
    %p102 = scmp.eq.s32.totalorder %s101, 0
    %s104 = sadd.s32 %s103, 1
    %s105 = scalar_select %p102, %s103, %s104
    %p108 = pneg %p102
    %p109 = scmp.eq.s32.totalorder %s12, 1
    %p110 = por %p108, %p109
    %p111 = scmp.ne.s32.totalorder %s103, %s106
    %p112 = scmp.eq.s32.totalorder %s12, 0
    %p113 = por %p111, %p112
    %p114 = scmp.ne.s32.totalorder %s103, %s106
    %p115 = scmp.eq.s32.totalorder %s17, 1
    %p116 = por %p114, %p115
    %p117 = scmp.ne.s32.totalorder %s106, %s107
    %p118 = scmp.eq.s32.totalorder %s17, 0
    %p119 = por %p117, %p118
    %p120 = scmp.ne.s32.totalorder %s106, %s107
    %p121 = scmp.eq.s32.totalorder %s18, 1
    %p122 = por %p120, %p121
    %p124 = scmp.ne.s32.totalorder %s107, %s123
    %p125 = scmp.eq.s32.totalorder %s18, 0
    %p126 = por %p124, %p125
    %s127 = ssub.s32 %s20, %s34
    %p128 = scmp.eq.s32.totalorder %s127, 0
    %s130 = sadd.s32 %s129, 1
    %s131 = scalar_select %p128, %s129, %s130
    %p134 = pneg %p128
    %p135 = scmp.eq.s32.totalorder %s12, 1
    %p136 = por %p134, %p135
    %p137 = scmp.ne.s32.totalorder %s129, %s132
    %p138 = scmp.eq.s32.totalorder %s12, 0
    %p139 = por %p137, %p138
    %p140 = scmp.ne.s32.totalorder %s129, %s132
    %p141 = scmp.eq.s32.totalorder %s17, 1
    %p142 = por %p140, %p141
    %p143 = scmp.ne.s32.totalorder %s132, %s133
    %p144 = scmp.eq.s32.totalorder %s17, 0
    %p145 = por %p143, %p144
    %p146 = scmp.ne.s32.totalorder %s132, %s133
    %p147 = scmp.eq.s32.totalorder %s18, 1
    %p148 = por %p146, %p147
    %p150 = scmp.ne.s32.totalorder %s133, %s149
    %p151 = scmp.eq.s32.totalorder %s18, 0
    %p152 = por %p150, %p151
    %s153 = ssub.s32 %s20, %s34
    %p154 = scmp.eq.s32.totalorder %s153, 0
    %s156 = sadd.s32 %s155, 1
    %s157 = scalar_select %p154, %s155, %s156
    %p160 = pneg %p154
    %p161 = scmp.eq.s32.totalorder %s12, 1
    %p162 = por %p160, %p161
    %p163 = scmp.ne.s32.totalorder %s155, %s158
    %p164 = scmp.eq.s32.totalorder %s12, 0
    %p165 = por %p163, %p164
    %p166 = scmp.ne.s32.totalorder %s155, %s158
    %p167 = scmp.eq.s32.totalorder %s17, 1
    %p168 = por %p166, %p167
    %p169 = scmp.ne.s32.totalorder %s158, %s159
    %p170 = scmp.eq.s32.totalorder %s17, 0
    %p171 = por %p169, %p170
    %p172 = scmp.ne.s32.totalorder %s158, %s159
    %p173 = scmp.eq.s32.totalorder %s18, 1
    %p174 = por %p172, %p173
    %p176 = scmp.ne.s32.totalorder %s159, %s175
    %p177 = scmp.eq.s32.totalorder %s18, 0
    %p178 = por %p176, %p177
    %s179 = ssub.s32 %s20, %s34
    %p180 = scmp.eq.s32.totalorder %s179, 0
    %s182 = sadd.s32 %s181, 1
    %s183 = scalar_select %p180, %s181, %s182
    %p186 = pneg %p180
    %p187 = scmp.eq.s32.totalorder %s12, 1
    %p188 = por %p186, %p187
    %p189 = scmp.ne.s32.totalorder %s181, %s184
    %p190 = scmp.eq.s32.totalorder %s12, 0
    %p191 = por %p189, %p190
    %p192 = scmp.ne.s32.totalorder %s181, %s184
    %p193 = scmp.eq.s32.totalorder %s17, 1
    %p194 = por %p192, %p193
    %p195 = scmp.ne.s32.totalorder %s184, %s185
    %p196 = scmp.eq.s32.totalorder %s17, 0
    %p197 = por %p195, %p196
    %p198 = scmp.ne.s32.totalorder %s184, %s185
    %p199 = scmp.eq.s32.totalorder %s18, 1
    %p200 = por %p198, %p199
    %p202 = scmp.ne.s32.totalorder %s185, %s201
    %p203 = scmp.eq.s32.totalorder %s18, 0
    %p204 = por %p202, %p203
    %s205 = ssub.s32 %s19, %s38
    %s206 = ssub.s32 %s21, %s30
    %s207 = sor.u32 %s205, %s206
    %s208 = ssub.s32 %s20, %s34
    %s209 = sor.u32 %s207, %s208
    %p210 = scmp.eq.s32.totalorder %s209, 0
    %s212 = sadd.s32 %s211, 1
    %s213 = scalar_select %p210, %s211, %s212
    %p216 = pneg %p210
    %p217 = scmp.eq.s32.totalorder %s12, 1
    %p218 = por %p216, %p217
    %p219 = scmp.ne.s32.totalorder %s211, %s214
    %p220 = scmp.eq.s32.totalorder %s12, 0
    %p221 = por %p219, %p220
    %p222 = scmp.ne.s32.totalorder %s211, %s214
    %p223 = scmp.eq.s32.totalorder %s17, 1
    %p224 = por %p222, %p223
    %p225 = scmp.ne.s32.totalorder %s214, %s215
    %p226 = scmp.eq.s32.totalorder %s17, 0
    %p227 = por %p225, %p226
    %p228 = scmp.ne.s32.totalorder %s214, %s215
    %p229 = scmp.eq.s32.totalorder %s18, 1
    %p230 = por %p228, %p229
    %p232 = scmp.ne.s32.totalorder %s215, %s231
    %p233 = scmp.eq.s32.totalorder %s18, 0
    %p234 = por %p232, %p233
    %p235 = scmp.le.s32.totalorder 1, %s12
    %p236 = scmp.lt.s32.totalorder %s12, 3
    %p237 = pnand %p235, %p236
    %p238 = pneg %p237
    // Predicated region
    $region9: #{down_forward.1} parent=5 // pred_check
      _
    $region10: #{down_forward.1} parent=5 // pred_check_branch
      %240 = sbr.rel (%p237) target = $region12
    $region11: #{down_forward.1} parent=5 // pred_region
      %s241 = ssub.s32 %s12, 1
      // Predicated region
      $region13: #{down_forward.1} parent=11 // pred_check
        %p242 = pneg %p145
      $region14: #{down_forward.1} parent=11 // pred_check_branch
        %244 = sbr.rel (%p242) target = $region16
      $region15: #{down_forward.1} parent=11 // pred_region
        %p245 = scmp.lt.s32.totalorder %s23, 0
        %s246 = scalar_select %p245, %s23, 0
        %s247 = smul.addr %s246, 8
        %s248 = scalar_lea.vmem %s3, %s247
      $region16: #{down_forward.1} parent=11 // pred_fallthru
        _
      // Predicated region
      $region17: #{down_forward.1} parent=11 // pred_check
        %p249 = pneg %p171
      $region18: #{down_forward.1} parent=11 // pred_check_branch
        %251 = sbr.rel (%p249) target = $region20
      $region19: #{down_forward.1} parent=11 // pred_region
        %p252 = scmp.lt.s32.totalorder %s23, 0
        %s253 = scalar_select %p252, %s23, 0
        %s254 = smul.addr %s253, 4
        %s255 = scalar_lea.vmem %s4, %s254
      $region20: #{down_forward.1} parent=11 // pred_fallthru
        _
      // Predicated region
      $region21: #{down_forward.1} parent=11 // pred_check
        %p256 = pneg %p197
      $region22: #{down_forward.1} parent=11 // pred_check_branch
        %258 = sbr.rel (%p256) target = $region24
      $region23: #{down_forward.1} parent=11 // pred_region
        %p259 = scmp.lt.s32.totalorder %s23, 0
        %s260 = scalar_select %p259, %s23, 0
        %s261 = scalar_lea.vmem %s5, %s260
      $region24: #{down_forward.1} parent=11 // pred_fallthru
        _
    $region12: #{down_forward.1} parent=5 // pred_fallthru
      _
    %p262 = scmp.lt.s32.totalorder %s12, 2
    // Predicated region
    $region25: #{down_forward.1} parent=5 // pred_check
      %p263 = pneg %p262
    $region26: #{down_forward.1} parent=5 // pred_check_branch
      %265 = sbr.rel (%p263) target = $region28
    $region27: #{down_forward.1} parent=5 // pred_region
      // Predicated region
      $region29: #{down_forward.1} parent=27 // pred_check
        %p266 = pneg %p53
      $region30: #{down_forward.1} parent=27 // pred_check_branch
        %268 = sbr.rel (%p266) target = $region32
      $region31: #{down_forward.1} parent=27 // pred_region
        %s269 = smul.u32 8, %s21
        %s270 = ssub.s32 9, %s269
        %p271 = scmp.lt.s32.totalorder %s270, 8
        %s272 = scalar_select %p271, %s270, 8
        %s273 = smul.u32 128, %s272
        %s274 = smul.u32 %s273, 2
        %p275 = scmp.lt.s32.totalorder %s19, 1
        %s276 = scalar_select %p275, %s19, 1
        %p277 = scmp.lt.s32.totalorder %s269, 8
        %s278 = scalar_select %p277, %s269, 8
        %s279 = smul.addr %s278, 2
        %s280 = smul.addr %s276, 18
        %s281 = sadd.s32 %s279, %s280
        %s282 = smul.addr %s281, 8
        %s283 = scalar_lea.vmem %s0, %s282
        %s284 = smul.u32 8, %s21
        %s285 = ssub.s32 9, %s284
        %p286 = scmp.lt.s32.totalorder %s285, 8
        %s287 = scalar_select %p286, %s285, 8
        %s288 = smul.u32 128, %s287
        %s289 = smul.u32 %s288, 2
      $region32: #{down_forward.1} parent=27 // pred_fallthru
        _
      // Predicated region
      $region33: #{down_forward.1} parent=27 // pred_check
        %p290 = pneg %p81
      $region34: #{down_forward.1} parent=27 // pred_check_branch
        %292 = sbr.rel (%p290) target = $region36
      $region35: #{down_forward.1} parent=27 // pred_region
        %s293 = smul.u32 8, %s21
        %p294 = scmp.lt.s32.totalorder %s19, 1
        %s295 = scalar_select %p294, %s19, 1
        %p296 = scmp.lt.s32.totalorder %s293, 7
        %s297 = scalar_select %p296, %s293, 7
        %s298 = smul.addr %s297, 2
        %s299 = smul.addr %s295, 16
        %s300 = sadd.s32 %s298, %s299
        %s301 = smul.addr %s300, 8
        %s302 = scalar_lea.vmem %s1, %s301
        %s303 = smul.u32 8, %s21
      $region36: #{down_forward.1} parent=27 // pred_fallthru
        _
      // Predicated region
      $region37: #{down_forward.1} parent=27 // pred_check
        %p304 = pneg %p113
      $region38: #{down_forward.1} parent=27 // pred_check_branch
        %306 = sbr.rel (%p304) target = $region40
      $region39: #{down_forward.1} parent=27 // pred_region
        %s307 = sadd.s32 %s21, 1
        %s308 = smul.u32 %s307, 8
        %p309 = scmp.lt.s32.totalorder %s19, 1
        %s310 = scalar_select %p309, %s19, 1
        %p311 = scmp.lt.s32.totalorder %s308, 8
        %s312 = scalar_select %p311, %s308, 8
        %s313 = smul.addr %s312, 2
        %s314 = smul.addr %s310, 18
        %s315 = sadd.s32 %s313, %s314
        %s316 = smul.addr %s315, 8
        %s317 = scalar_lea.vmem %s2, %s316
        %s318 = sadd.s32 %s21, 1
        %s319 = smul.u32 %s318, 8
      $region40: #{down_forward.1} parent=27 // pred_fallthru
        _
    $region28: #{down_forward.1} parent=5 // pred_fallthru
      _
    %p320 = scmp.le.s32.totalorder 1, %s12
    %p321 = scmp.lt.s32.totalorder %s12, 3
    %p322 = pnand %p320, %p321
    %p323 = pneg %p322
    // Predicated region
    $region41: #{down_forward.1} parent=5 // pred_check
      _
    $region42: #{down_forward.1} parent=5 // pred_check_branch
      %325 = sbr.rel (%p322) target = $region44
    $region43: #{down_forward.1} parent=5 // pred_region
      %s326 = ssub.s32 %s12, 1
      %s327 = smul.u32 8, %s24
      %s328 = ssub.s32 9, %s327
      %p329 = scmp.lt.s32.totalorder %s328, 8
      %s330 = scalar_select %p329, %s328, 8
      %s331 = smul.u32 128, %s330
      %s332 = smul.u32 %s331, 2
      %p333 = scmp.lt.s32.totalorder %s22, 1
      %s334 = scalar_select %p333, %s22, 1
      %p335 = scmp.lt.s32.totalorder %s327, 8
      %s336 = scalar_select %p335, %s327, 8
      %s337 = smul.addr %s336, 2
      %s338 = smul.addr %s334, 18
      %s339 = sadd.s32 %s337, %s338
      %s340 = smul.addr %s339, 8
      %s341 = scalar_lea.vmem %s0, %s340
      %p342 = pneg %p59
      %p343 = pneg %p56
      %s344 = smul.u32 8, %s24
      %p345 = scmp.lt.s32.totalorder %s22, 1
      %s346 = scalar_select %p345, %s22, 1
      %p347 = scmp.lt.s32.totalorder %s344, 7
      %s348 = scalar_select %p347, %s344, 7
      %s349 = smul.addr %s348, 2
      %s350 = smul.addr %s346, 16
      %s351 = sadd.s32 %s349, %s350
      %s352 = smul.addr %s351, 8
      %s353 = scalar_lea.vmem %s1, %s352
      %p354 = pneg %p87
      %p355 = pneg %p84
      %s356 = sadd.s32 %s24, 1
      %s357 = smul.u32 %s356, 8
      %p358 = scmp.lt.s32.totalorder %s22, 1
      %s359 = scalar_select %p358, %s22, 1
      %p360 = scmp.lt.s32.totalorder %s357, 8
      %s361 = scalar_select %p360, %s357, 8
      %s362 = smul.addr %s361, 2
      %s363 = smul.addr %s359, 18
      %s364 = sadd.s32 %s362, %s363
      %s365 = smul.addr %s364, 8
      %s366 = scalar_lea.vmem %s2, %s365
      %p367 = pneg %p119
      %p368 = pneg %p116
      %p369 = scmp.lt.s32.totalorder %s23, 0
      %s370 = scalar_select %p369, %s23, 0
      %s371 = smul.addr %s370, 8
      %s372 = scalar_lea.vmem %s3, %s371
      %p373 = pneg %p145
      %p374 = pneg %p142
      %p375 = scmp.lt.s32.totalorder %s23, 0
      %s376 = scalar_select %p375, %s23, 0
      %s377 = smul.addr %s376, 4
      %s378 = scalar_lea.vmem %s4, %s377
      %p379 = pneg %p171
      %p380 = pneg %p168
      %p381 = scmp.lt.s32.totalorder %s23, 0
      %s382 = scalar_select %p381, %s23, 0
      %s383 = scalar_lea.vmem %s5, %s382
      %p384 = pneg %p197
      %p385 = pneg %p194
      %p386 = pneg %p227
      %p387 = pneg %p224
      %s388 = smul.u32 8, %s24
      %p389 = scmp.lt.s32.totalorder %s22, 1
      %s390 = scalar_select %p389, %s22, 1
      %p391 = scmp.lt.s32.totalorder %s388, 7
      %s392 = scalar_select %p391, %s388, 7
      %p393 = scmp.lt.s32.totalorder %s23, 0
      %s394 = scalar_select %p393, %s23, 0
      %s395 = sadd.s32 %s394, %s392
      %s396 = smul.addr %s390, 8
      %s397 = sadd.s32 %s395, %s396
      %s398 = smul.addr %s397, 8
      %s399 = scalar_lea.vmem %s6, %s398
      %s400 = smul.u32 8, %s24
      %s401 = ssub.s32 9, %s400
      %p402 = scmp.lt.s32.totalorder %s401, 8
      %s403 = scalar_select %p402, %s401, 8
      %s404 = smul.u32 128, %s403
      %s405 = smul.u32 %s404, 2
      %p406 = scmp.lt.s32.totalorder %s22, 1
      %s407 = scalar_select %p406, %s22, 1
      %p408 = scmp.lt.s32.totalorder %s400, 8
      %s409 = scalar_select %p408, %s400, 8
      %s410 = smul.addr %s409, 2
      %s411 = smul.addr %s407, 18
      %s412 = sadd.s32 %s410, %s411
      %s413 = smul.addr %s412, 8
      %s414 = scalar_lea.vmem %s0, %s413
      %s415 = smul.u32 8, %s24
      %s416 = ssub.s32 9, %s415
      %p417 = scmp.lt.s32.totalorder %s416, 8
      %s418 = scalar_select %p417, %s416, 8
      %s419 = smul.u32 128, %s418
      %s420 = smul.u32 %s419, 2
      %s421 = smul.u32 8, %s24
      %p422 = scmp.lt.s32.totalorder %s22, 1
      %s423 = scalar_select %p422, %s22, 1
      %p424 = scmp.lt.s32.totalorder %s421, 7
      %s425 = scalar_select %p424, %s421, 7
      %s426 = smul.addr %s425, 2
      %s427 = smul.addr %s423, 16
      %s428 = sadd.s32 %s426, %s427
      %s429 = smul.addr %s428, 8
      %s430 = scalar_lea.vmem %s1, %s429
      %s431 = smul.u32 8, %s24
      %s432 = sadd.s32 %s24, 1
      %s433 = smul.u32 %s432, 8
      %p434 = scmp.lt.s32.totalorder %s22, 1
      %s435 = scalar_select %p434, %s22, 1
      %p436 = scmp.lt.s32.totalorder %s433, 8
      %s437 = scalar_select %p436, %s433, 8
      %s438 = smul.addr %s437, 2
      %s439 = smul.addr %s435, 18
      %s440 = sadd.s32 %s438, %s439
      %s441 = smul.addr %s440, 8
      %s442 = scalar_lea.vmem %s2, %s441
      %s443 = sadd.s32 %s24, 1
      %s444 = smul.u32 %s443, 8
      %p445 = scmp.lt.s32.totalorder %s23, 0
      %s446 = scalar_select %p445, %s23, 0
      %s447 = smul.addr %s446, 8
      %s448 = scalar_lea.vmem %s3, %s447
      %p449 = scmp.lt.s32.totalorder %s23, 0
      %s450 = scalar_select %p449, %s23, 0
      %s451 = smul.addr %s450, 4
      %s452 = scalar_lea.vmem %s4, %s451
      %p453 = scmp.lt.s32.totalorder %s23, 0
      %s454 = scalar_select %p453, %s23, 0
      %s455 = scalar_lea.vmem %s5, %s454
      %s456 = smul.u32 8, %s24
      %p457 = scmp.lt.s32.totalorder %s22, 1
      %s458 = scalar_select %p457, %s22, 1
      %p459 = scmp.lt.s32.totalorder %s456, 7
      %s460 = scalar_select %p459, %s456, 7
      %p461 = scmp.lt.s32.totalorder %s23, 0
      %s462 = scalar_select %p461, %s23, 0
      %s463 = sadd.s32 %s462, %s460
      %s464 = smul.addr %s458, 8
      %s465 = sadd.s32 %s463, %s464
      %s466 = smul.addr %s465, 8
      %s467 = scalar_lea.vmem %s6, %s466
      %s468 = smul.u32 8, %s24
      %s469 = scalar_lea.vmem %s414, 16
      %v470 = vld [vmem:[%s469] sm:$0xff]
      %v471 = vld [vmem:[%s469 + $0x8] sm:$0x1]
      %v472 = vld [vmem:[%s469 + $0x10] sm:$0xff]
      %v473 = vld [vmem:[%s469 + $0x18] sm:$0x1]
      %v474 = vld [vmem:[%s469 + $0x20] sm:$0xff]
      %v475 = vld [vmem:[%s469 + $0x28] sm:$0x1]
      %v476 = vld [vmem:[%s469 + $0x30] sm:$0xff]
      %v477 = vld [vmem:[%s469 + $0x38] sm:$0x1]
      %v478 = vld [vmem:[%s469 + $0x40] sm:$0xff]
      %v479 = vld [vmem:[%s469 + $0x48] sm:$0x1]
      %v480 = vld [vmem:[%s469 + $0x50] sm:$0xff]
      %v481 = vld [vmem:[%s469 + $0x58] sm:$0x1]
      %v482 = vld [vmem:[%s469 + $0x60] sm:$0xff]
      %v483 = vld [vmem:[%s469 + $0x68] sm:$0x1]
      %vm484 = vcmask 64512
      %485 = vst.msk [vmem:[#allocation2] sm:$0xff] %vm484, %v470
      %vm486 = vcmask 57344
      %487 = vst.msk [vmem:[#allocation2 + $0x8] sm:$0x1] %vm486, %v471
      %488 = vst.msk [vmem:[#allocation2 + $0x10] sm:$0xff] %vm484, %v472
      %489 = vst.msk [vmem:[#allocation2 + $0x18] sm:$0x1] %vm486, %v473
      %490 = vst.msk [vmem:[#allocation2 + $0x20] sm:$0xff] %vm484, %v474
      %491 = vst.msk [vmem:[#allocation2 + $0x28] sm:$0x1] %vm486, %v475
      %492 = vst.msk [vmem:[#allocation2 + $0x30] sm:$0xff] %vm484, %v476
      %493 = vst.msk [vmem:[#allocation2 + $0x38] sm:$0x1] %vm486, %v477
      %494 = vst.msk [vmem:[#allocation2 + $0x40] sm:$0xff] %vm484, %v478
      %495 = vst.msk [vmem:[#allocation2 + $0x48] sm:$0x1] %vm486, %v479
      %496 = vst.msk [vmem:[#allocation2 + $0x50] sm:$0xff] %vm484, %v480
      %497 = vst.msk [vmem:[#allocation2 + $0x58] sm:$0x1] %vm486, %v481
      %498 = vst.msk [vmem:[#allocation2 + $0x60] sm:$0xff] %vm484, %v482
      %499 = vst.msk [vmem:[#allocation2 + $0x68] sm:$0x1] %vm486, %v483
      %v500 = vld [vmem:[%s442] sm:$0xff]
      %v501 = vld [vmem:[%s442 + $0x8] sm:$0x1]
      %s502 = scalar_lea.vmem [#allocation2], 112
      %503 = vst.msk [vmem:[%s502] sm:$0xff] %vm484, %v500
      %504 = vst.msk [vmem:[%s502 + $0x8] sm:$0x1] %vm486, %v501
      %v505 = vld [vmem:[%s414] sm:$0xff]
      %v506 = vld [vmem:[%s414 + $0x10] sm:$0xff]
      %v507 = vld [vmem:[%s414 + $0x20] sm:$0xff]
      %v508 = vld [vmem:[%s414 + $0x30] sm:$0xff]
      %v509 = vld [vmem:[%s414 + $0x40] sm:$0xff]
      %v510 = vld [vmem:[%s414 + $0x50] sm:$0xff]
      %v511 = vld [vmem:[%s414 + $0x60] sm:$0xff]
      %v512 = vld [vmem:[%s414 + $0x70] sm:$0xff]
      %v513 = vld [vmem:[%s448] sm:$0xff]
      %v514 = vld [vmem:[%s414 + $0x1] sm:$0xff]
      %v515 = vld [vmem:[%s414 + $0x11] sm:$0xff]
      %v516 = vld [vmem:[%s414 + $0x21] sm:$0xff]
      %v517 = vld [vmem:[%s414 + $0x31] sm:$0xff]
      %v518 = vld [vmem:[%s414 + $0x41] sm:$0xff]
      %v519 = vld [vmem:[%s414 + $0x51] sm:$0xff]
      %v520 = vld [vmem:[%s414 + $0x61] sm:$0xff]
      %v521 = vld [vmem:[%s414 + $0x71] sm:$0xff]
      %v522 = vld [vmem:[%s452] sm:$0xf]
      %vm523 = vcmask 31744
      %v525 = vsel %vm523, %v514, 0
      %v528 = vsel %vm523, %v515, 0
      %v531 = vsel %vm523, %v516, 0
      %v534 = vsel %vm523, %v517, 0
      %v537 = vsel %vm523, %v518, 0
      %v540 = vsel %vm523, %v519, 0
      %v543 = vsel %vm523, %v520, 0
      %v546 = vsel %vm523, %v521, 0
      %vm548 = vcmask 1043456
      %v550 = vsel %vm548, %v522, 0
      %552 = vmatprep.subr.mxu0 0.0
      %553 = vmatpush1.msra.mxu0 0.0
      %554 = vmatprep.subr.mxu0 0.0
      %555 = vmatpush1.msra.mxu0 0.0
      %556 = vmatprep.subr.mxu0 0.0
      %557 = vmatpush1.msra.mxu0 0.0
      %558 = vmatprep.subr.mxu0 0.0
      %559 = vmatpush1.msra.mxu0 0.0
      %560 = vmatprep.subr.mxu0 0.0
      %561 = vmatpush1.msra.mxu0 0.0
      %562 = vmatprep.subr.mxu0 0.0
      %563 = vmatpush1.msra.mxu0 0.0
      %564 = vmatprep.subr.mxu0 0.0
      %565 = vmatpush1.msra.mxu0 0.0
      %566 = vmatprep.subr.mxu0 0.0
      %567 = vmatpush1.msra.mxu0 0.0
      %568 = vmatprep.subr.mxu0 0.0
      %569 = vmatpush1.msra.mxu0 0.0
      %570 = vmatprep.subr.mxu0 0.0
      %571 = vmatpush1.msra.mxu0 0.0
      %572 = vmatprep.subr.mxu0 0.0
      %573 = vmatpush1.msra.mxu0 0.0
      %574 = vmatprep.subr.mxu0 0.0
      %575 = vmatpush1.msra.mxu0 0.0
      %576 = vmatprep.subr.mxu0 0.0
      %577 = vmatpush1.msra.mxu0 0.0
      %578 = vmatprep.subr.mxu0 0.0
      %579 = vmatpush1.msra.mxu0 0.0
      %580 = vmatprep.subr.mxu0 0.0
      %581 = vmatpush1.msra.mxu0 0.0
      %582 = vmatprep.subr.mxu0 0.0
      %583 = vmatpush1.msra.mxu0 %v550
      %584 = vmatprep.subr.mxu0 0.0
      %585 = vmatpush2.msra.mxu0 0.0
      %586 = vmatprep.subr.mxu0 0.0
      %587 = vmatpush2.msra.mxu0 0.0
      %588 = vmatprep.subr.mxu0 0.0
      %589 = vmatpush2.msra.mxu0 0.0
      %590 = vmatprep.subr.mxu0 0.0
      %591 = vmatpush2.msra.mxu0 0.0
      %592 = vmatprep.subr.mxu0 0.0
      %593 = vmatpush2.msra.mxu0 0.0
      %594 = vmatprep.subr.mxu0 0.0
      %595 = vmatpush2.msra.mxu0 0.0
      %596 = vmatprep.subr.mxu0 0.0
      %597 = vmatpush2.msra.mxu0 0.0
      %598 = vmatprep.subr.mxu0 0.0
      %599 = vmatpush2.msra.mxu0 0.0
      %600 = vmatprep.subr.mxu0 0.0
      %601 = vmatpush2.msra.mxu0 0.0
      %602 = vmatprep.subr.mxu0 0.0
      %603 = vmatpush2.msra.mxu0 0.0
      %604 = vmatprep.subr.mxu0 0.0
      %605 = vmatpush2.msra.mxu0 0.0
      %606 = vmatprep.subr.mxu0 0.0
      %607 = vmatpush2.msra.mxu0 0.0
      %608 = vmatprep.subr.mxu0 0.0
      %609 = vmatpush2.msra.mxu0 0.0
      %610 = vmatprep.subr.mxu0 0.0
      %611 = vmatpush2.msra.mxu0 0.0
      %612 = vmatprep.subr.mxu0 0.0
      %613 = vmatpush2.msra.mxu0 0.0
      %614 = vmatprep.subr.mxu0 0.0
      %615 = vmatpush2.msra.mxu0 0.0
      %616 = vmatprep.mubr.f32.mxu0 0.0
      %617 = vmatmul.mubr.f32.gmra.mxu0 %v525
      %v618 = vpop.f32.mrf.mxu0
      %v619 = vadd.f32 0.0, %v618
      %v620 = vpop.f32.mrf.mxu0
      %621 = vmatprep.mubr.f32.mxu0 0.0
      %622 = vmatmul.mubr.f32.gmra.mxu0 %v528
      %v623 = vpop.f32.mrf.mxu0
      %v624 = vadd.f32 0.0, %v623
      %v625 = vpop.f32.mrf.mxu0
      %626 = vmatprep.mubr.f32.mxu0 0.0
      %627 = vmatmul.mubr.f32.gmra.mxu0 %v531
      %v628 = vpop.f32.mrf.mxu0
      %v629 = vadd.f32 0.0, %v628
      %v630 = vpop.f32.mrf.mxu0
      %631 = vmatprep.mubr.f32.mxu0 0.0
      %632 = vmatmul.mubr.f32.gmra.mxu0 %v534
      %v633 = vpop.f32.mrf.mxu0
      %v634 = vadd.f32 0.0, %v633
      %v635 = vpop.f32.mrf.mxu0
      %636 = vmatprep.mubr.f32.mxu0 0.0
      %637 = vmatmul.mubr.f32.gmra.mxu0 %v537
      %v638 = vpop.f32.mrf.mxu0
      %v639 = vadd.f32 0.0, %v638
      %v640 = vpop.f32.mrf.mxu0
      %641 = vmatprep.mubr.f32.mxu0 0.0
      %642 = vmatmul.mubr.f32.gmra.mxu0 %v540
      %v643 = vpop.f32.mrf.mxu0
      %v644 = vadd.f32 0.0, %v643
      %v645 = vpop.f32.mrf.mxu0
      %646 = vmatprep.mubr.f32.mxu0 0.0
      %647 = vmatmul.mubr.f32.gmra.mxu0 %v543
      %v648 = vpop.f32.mrf.mxu0
      %v649 = vadd.f32 0.0, %v648
      %v650 = vpop.f32.mrf.mxu0
      %651 = vmatprep.mubr.f32.mxu0 0.0
      %652 = vmatmul.mubr.f32.gmra.mxu0 %v546
      %v653 = vpop.f32.mrf.mxu0
      %v654 = vadd.f32 0.0, %v653
      %v655 = vpop.f32.mrf.mxu0
      %656 = vdwg.mxu0
      %v658 = vsel %vm484, %v505, 0
      %v661 = vsel %vm484, %v506, 0
      %v664 = vsel %vm484, %v507, 0
      %v667 = vsel %vm484, %v508, 0
      %v670 = vsel %vm484, %v509, 0
      %v673 = vsel %vm484, %v510, 0
      %v676 = vsel %vm484, %v511, 0
      %v679 = vsel %vm484, %v512, 0
      %681 = vmatprep.subr.mxu0 0.0
      %682 = vmatpush1.msra.mxu0 0.0
      %683 = vmatprep.subr.mxu0 0.0
      %684 = vmatpush1.msra.mxu0 0.0
      %685 = vmatprep.subr.mxu0 0.0
      %686 = vmatpush1.msra.mxu0 0.0
      %687 = vmatprep.subr.mxu0 0.0
      %688 = vmatpush1.msra.mxu0 0.0
      %689 = vmatprep.subr.mxu0 0.0
      %690 = vmatpush1.msra.mxu0 0.0
      %691 = vmatprep.subr.mxu0 0.0
      %692 = vmatpush1.msra.mxu0 0.0
      %693 = vmatprep.subr.mxu0 0.0
      %694 = vmatpush1.msra.mxu0 0.0
      %695 = vmatprep.subr.mxu0 0.0
      %696 = vmatpush1.msra.mxu0 0.0
      %697 = vmatprep.subr.mxu0 0.0
      %698 = vmatpush1.msra.mxu0 0.0
      %699 = vmatprep.subr.mxu0 0.0
      %700 = vmatpush1.msra.mxu0 0.0
      %701 = vmatprep.subr.mxu0 0.0
      %702 = vmatpush1.msra.mxu0 0.0
      %703 = vmatprep.subr.mxu0 0.0
      %704 = vmatpush1.msra.mxu0 0.0
      %705 = vmatprep.subr.mxu0 0.0
      %706 = vmatpush1.msra.mxu0 0.0
      %707 = vmatprep.subr.mxu0 0.0
      %708 = vmatpush1.msra.mxu0 0.0
      %709 = vmatprep.subr.mxu0 0.0
      %710 = vmatpush1.msra.mxu0 0.0
      %711 = vmatprep.subr.mxu0 0.0
      %712 = vmatpush1.msra.mxu0 %v513
      %713 = vmatprep.subr.mxu0 0.0
      %714 = vmatpush2.msra.mxu0 0.0
      %715 = vmatprep.subr.mxu0 0.0
      %716 = vmatpush2.msra.mxu0 0.0
      %717 = vmatprep.subr.mxu0 0.0
      %718 = vmatpush2.msra.mxu0 0.0
      %719 = vmatprep.subr.mxu0 0.0
      %720 = vmatpush2.msra.mxu0 0.0
      %721 = vmatprep.subr.mxu0 0.0
      %722 = vmatpush2.msra.mxu0 0.0
      %723 = vmatprep.subr.mxu0 0.0
      %724 = vmatpush2.msra.mxu0 0.0
      %725 = vmatprep.subr.mxu0 0.0
      %726 = vmatpush2.msra.mxu0 0.0
      %727 = vmatprep.subr.mxu0 0.0
      %728 = vmatpush2.msra.mxu0 0.0
      %729 = vmatprep.subr.mxu0 0.0
      %730 = vmatpush2.msra.mxu0 0.0
      %731 = vmatprep.subr.mxu0 0.0
      %732 = vmatpush2.msra.mxu0 0.0
      %733 = vmatprep.subr.mxu0 0.0
      %734 = vmatpush2.msra.mxu0 0.0
      %735 = vmatprep.subr.mxu0 0.0
      %736 = vmatpush2.msra.mxu0 0.0
      %737 = vmatprep.subr.mxu0 0.0
      %738 = vmatpush2.msra.mxu0 0.0
      %739 = vmatprep.subr.mxu0 0.0
      %740 = vmatpush2.msra.mxu0 0.0
      %741 = vmatprep.subr.mxu0 0.0
      %742 = vmatpush2.msra.mxu0 0.0
      %743 = vmatprep.subr.mxu0 0.0
      %744 = vmatpush2.msra.mxu0 0.0
      %745 = vmatprep.mubr.f32.mxu0 0.0
      %746 = vmatmul.mubr.f32.gmra.mxu0 %v658
      %v747 = vpop.f32.mrf.mxu0
      %v748 = vadd.f32 %v619, %v747
      %v749 = vpop.f32.mrf.mxu0
      %750 = vmatprep.mubr.f32.mxu0 0.0
      %751 = vmatmul.mubr.f32.gmra.mxu0 %v661
      %v752 = vpop.f32.mrf.mxu0
      %v753 = vadd.f32 %v624, %v752
      %v754 = vpop.f32.mrf.mxu0
      %755 = vmatprep.mubr.f32.mxu0 0.0
      %756 = vmatmul.mubr.f32.gmra.mxu0 %v664
      %v757 = vpop.f32.mrf.mxu0
      %v758 = vadd.f32 %v629, %v757
      %v759 = vpop.f32.mrf.mxu0
      %760 = vmatprep.mubr.f32.mxu0 0.0
      %761 = vmatmul.mubr.f32.gmra.mxu0 %v667
      %v762 = vpop.f32.mrf.mxu0
      %v763 = vadd.f32 %v634, %v762
      %v764 = vpop.f32.mrf.mxu0
      %765 = vmatprep.mubr.f32.mxu0 0.0
      %766 = vmatmul.mubr.f32.gmra.mxu0 %v670
      %v767 = vpop.f32.mrf.mxu0
      %v768 = vadd.f32 %v639, %v767
      %v769 = vpop.f32.mrf.mxu0
      %770 = vmatprep.mubr.f32.mxu0 0.0
      %771 = vmatmul.mubr.f32.gmra.mxu0 %v673
      %v772 = vpop.f32.mrf.mxu0
      %v773 = vadd.f32 %v644, %v772
      %v774 = vpop.f32.mrf.mxu0
      %775 = vmatprep.mubr.f32.mxu0 0.0
      %776 = vmatmul.mubr.f32.gmra.mxu0 %v676
      %v777 = vpop.f32.mrf.mxu0
      %v778 = vadd.f32 %v649, %v777
      %v779 = vpop.f32.mrf.mxu0
      %780 = vmatprep.mubr.f32.mxu0 0.0
      %781 = vmatmul.mubr.f32.gmra.mxu0 %v679
      %v782 = vpop.f32.mrf.mxu0
      %v783 = vadd.f32 %v654, %v782
      %v784 = vpop.f32.mrf.mxu0
      %785 = vdwg.mxu0
      %v786 = vld [vmem:[%s430] sm:$0xff]
      %v787 = vld [vmem:[%s430 + $0x10] sm:$0xff]
      %v788 = vld [vmem:[%s430 + $0x20] sm:$0xff]
      %v789 = vld [vmem:[%s430 + $0x30] sm:$0xff]
      %v790 = vld [vmem:[%s430 + $0x40] sm:$0xff]
      %v791 = vld [vmem:[%s430 + $0x50] sm:$0xff]
      %v792 = vld [vmem:[%s430 + $0x60] sm:$0xff]
      %v793 = vld [vmem:[%s430 + $0x70] sm:$0xff]
      %s794 = scalar_lea.vmem %s448, 8
      %v795 = vld [vmem:[%s794] sm:$0xff]
      %v797 = vsel %vm484, %v786, 0
      %v800 = vsel %vm484, %v787, 0
      %v803 = vsel %vm484, %v788, 0
      %v806 = vsel %vm484, %v789, 0
      %v809 = vsel %vm484, %v790, 0
      %v812 = vsel %vm484, %v791, 0
      %v815 = vsel %vm484, %v792, 0
      %v818 = vsel %vm484, %v793, 0
      %820 = vmatprep.subr.mxu0 0.0
      %821 = vmatpush1.msra.mxu0 0.0
      %822 = vmatprep.subr.mxu0 0.0
      %823 = vmatpush1.msra.mxu0 0.0
      %824 = vmatprep.subr.mxu0 0.0
      %825 = vmatpush1.msra.mxu0 0.0
      %826 = vmatprep.subr.mxu0 0.0
      %827 = vmatpush1.msra.mxu0 0.0
      %828 = vmatprep.subr.mxu0 0.0
      %829 = vmatpush1.msra.mxu0 0.0
      %830 = vmatprep.subr.mxu0 0.0
      %831 = vmatpush1.msra.mxu0 0.0
      %832 = vmatprep.subr.mxu0 0.0
      %833 = vmatpush1.msra.mxu0 0.0
      %834 = vmatprep.subr.mxu0 0.0
      %835 = vmatpush1.msra.mxu0 0.0
      %836 = vmatprep.subr.mxu0 0.0
      %837 = vmatpush1.msra.mxu0 0.0
      %838 = vmatprep.subr.mxu0 0.0
      %839 = vmatpush1.msra.mxu0 0.0
      %840 = vmatprep.subr.mxu0 0.0
      %841 = vmatpush1.msra.mxu0 0.0
      %842 = vmatprep.subr.mxu0 0.0
      %843 = vmatpush1.msra.mxu0 0.0
      %844 = vmatprep.subr.mxu0 0.0
      %845 = vmatpush1.msra.mxu0 0.0
      %846 = vmatprep.subr.mxu0 0.0
      %847 = vmatpush1.msra.mxu0 0.0
      %848 = vmatprep.subr.mxu0 0.0
      %849 = vmatpush1.msra.mxu0 0.0
      %850 = vmatprep.subr.mxu0 0.0
      %851 = vmatpush1.msra.mxu0 %v795
      %852 = vmatprep.subr.mxu0 0.0
      %853 = vmatpush2.msra.mxu0 0.0
      %854 = vmatprep.subr.mxu0 0.0
      %855 = vmatpush2.msra.mxu0 0.0
      %856 = vmatprep.subr.mxu0 0.0
      %857 = vmatpush2.msra.mxu0 0.0
      %858 = vmatprep.subr.mxu0 0.0
      %859 = vmatpush2.msra.mxu0 0.0
      %860 = vmatprep.subr.mxu0 0.0
      %861 = vmatpush2.msra.mxu0 0.0
      %862 = vmatprep.subr.mxu0 0.0
      %863 = vmatpush2.msra.mxu0 0.0
      %864 = vmatprep.subr.mxu0 0.0
      %865 = vmatpush2.msra.mxu0 0.0
      %866 = vmatprep.subr.mxu0 0.0
      %867 = vmatpush2.msra.mxu0 0.0
      %868 = vmatprep.subr.mxu0 0.0
      %869 = vmatpush2.msra.mxu0 0.0
      %870 = vmatprep.subr.mxu0 0.0
      %871 = vmatpush2.msra.mxu0 0.0
      %872 = vmatprep.subr.mxu0 0.0
      %873 = vmatpush2.msra.mxu0 0.0
      %874 = vmatprep.subr.mxu0 0.0
      %875 = vmatpush2.msra.mxu0 0.0
      %876 = vmatprep.subr.mxu0 0.0
      %877 = vmatpush2.msra.mxu0 0.0
      %878 = vmatprep.subr.mxu0 0.0
      %879 = vmatpush2.msra.mxu0 0.0
      %880 = vmatprep.subr.mxu0 0.0
      %881 = vmatpush2.msra.mxu0 0.0
      %882 = vmatprep.subr.mxu0 0.0
      %883 = vmatpush2.msra.mxu0 0.0
      %884 = vmatprep.mubr.f32.mxu0 0.0
      %885 = vmatmul.mubr.f32.gmra.mxu0 %v797
      %v886 = vpop.f32.mrf.mxu0
      %v887 = vadd.f32 0.0, %v886
      %v888 = vpop.f32.mrf.mxu0
      %889 = vmatprep.mubr.f32.mxu0 0.0
      %890 = vmatmul.mubr.f32.gmra.mxu0 %v800
      %v891 = vpop.f32.mrf.mxu0
      %v892 = vadd.f32 0.0, %v891
      %v893 = vpop.f32.mrf.mxu0
      %894 = vmatprep.mubr.f32.mxu0 0.0
      %895 = vmatmul.mubr.f32.gmra.mxu0 %v803
      %v896 = vpop.f32.mrf.mxu0
      %v897 = vadd.f32 0.0, %v896
      %v898 = vpop.f32.mrf.mxu0
      %899 = vmatprep.mubr.f32.mxu0 0.0
      %900 = vmatmul.mubr.f32.gmra.mxu0 %v806
      %v901 = vpop.f32.mrf.mxu0
      %v902 = vadd.f32 0.0, %v901
      %v903 = vpop.f32.mrf.mxu0
      %904 = vmatprep.mubr.f32.mxu0 0.0
      %905 = vmatmul.mubr.f32.gmra.mxu0 %v809
      %v906 = vpop.f32.mrf.mxu0
      %v907 = vadd.f32 0.0, %v906
      %v908 = vpop.f32.mrf.mxu0
      %909 = vmatprep.mubr.f32.mxu0 0.0
      %910 = vmatmul.mubr.f32.gmra.mxu0 %v812
      %v911 = vpop.f32.mrf.mxu0
      %v912 = vadd.f32 0.0, %v911
      %v913 = vpop.f32.mrf.mxu0
      %914 = vmatprep.mubr.f32.mxu0 0.0
      %915 = vmatmul.mubr.f32.gmra.mxu0 %v815
      %v916 = vpop.f32.mrf.mxu0
      %v917 = vadd.f32 0.0, %v916
      %v918 = vpop.f32.mrf.mxu0
      %919 = vmatprep.mubr.f32.mxu0 0.0
      %920 = vmatmul.mubr.f32.gmra.mxu0 %v818
      %v921 = vpop.f32.mrf.mxu0
      %v922 = vadd.f32 0.0, %v921
      %v923 = vpop.f32.mrf.mxu0
      %924 = vdwg.mxu0
      %v925 = vadd.f32 %v748, %v887
      %v926 = vadd.f32 %v753, %v892
      %v927 = vadd.f32 %v758, %v897
      %v928 = vadd.f32 %v763, %v902
      %v929 = vadd.f32 %v768, %v907
      %v930 = vadd.f32 %v773, %v912
      %v931 = vadd.f32 %v778, %v917
      %v932 = vadd.f32 %v783, %v922
      %v933 = vld [vmem:[%s430 + $0x1] sm:$0xff]
      %v934 = vld [vmem:[%s430 + $0x11] sm:$0xff]
      %v935 = vld [vmem:[%s430 + $0x21] sm:$0xff]
      %v936 = vld [vmem:[%s430 + $0x31] sm:$0xff]
      %v937 = vld [vmem:[%s430 + $0x41] sm:$0xff]
      %v938 = vld [vmem:[%s430 + $0x51] sm:$0xff]
      %v939 = vld [vmem:[%s430 + $0x61] sm:$0xff]
      %v940 = vld [vmem:[%s430 + $0x71] sm:$0xff]
      %s941 = scalar_lea.vmem %s452, 4
      %v942 = vld [vmem:[%s941] sm:$0xf]
      %v944 = vsel %vm523, %v933, 0
      %v947 = vsel %vm523, %v934, 0
      %v950 = vsel %vm523, %v935, 0
      %v953 = vsel %vm523, %v936, 0
      %v956 = vsel %vm523, %v937, 0
      %v959 = vsel %vm523, %v938, 0
      %v962 = vsel %vm523, %v939, 0
      %v965 = vsel %vm523, %v940, 0
      %v968 = vsel %vm548, %v942, 0
      %970 = vmatprep.subr.mxu0 0.0
      %971 = vmatpush1.msra.mxu0 0.0
      %972 = vmatprep.subr.mxu0 0.0
      %973 = vmatpush1.msra.mxu0 0.0
      %974 = vmatprep.subr.mxu0 0.0
      %975 = vmatpush1.msra.mxu0 0.0
      %976 = vmatprep.subr.mxu0 0.0
      %977 = vmatpush1.msra.mxu0 0.0
      %978 = vmatprep.subr.mxu0 0.0
      %979 = vmatpush1.msra.mxu0 0.0
      %980 = vmatprep.subr.mxu0 0.0
      %981 = vmatpush1.msra.mxu0 0.0
      %982 = vmatprep.subr.mxu0 0.0
      %983 = vmatpush1.msra.mxu0 0.0
      %984 = vmatprep.subr.mxu0 0.0
      %985 = vmatpush1.msra.mxu0 0.0
      %986 = vmatprep.subr.mxu0 0.0
      %987 = vmatpush1.msra.mxu0 0.0
      %988 = vmatprep.subr.mxu0 0.0
      %989 = vmatpush1.msra.mxu0 0.0
      %990 = vmatprep.subr.mxu0 0.0
      %991 = vmatpush1.msra.mxu0 0.0
      %992 = vmatprep.subr.mxu0 0.0
      %993 = vmatpush1.msra.mxu0 0.0
      %994 = vmatprep.subr.mxu0 0.0
      %995 = vmatpush1.msra.mxu0 0.0
      %996 = vmatprep.subr.mxu0 0.0
      %997 = vmatpush1.msra.mxu0 0.0
      %998 = vmatprep.subr.mxu0 0.0
      %999 = vmatpush1.msra.mxu0 0.0
      %1000 = vmatprep.subr.mxu0 0.0
      %1001 = vmatpush1.msra.mxu0 %v968
      %1002 = vmatprep.subr.mxu0 0.0
      %1003 = vmatpush2.msra.mxu0 0.0
      %1004 = vmatprep.subr.mxu0 0.0
      %1005 = vmatpush2.msra.mxu0 0.0
      %1006 = vmatprep.subr.mxu0 0.0
      %1007 = vmatpush2.msra.mxu0 0.0
      %1008 = vmatprep.subr.mxu0 0.0
      %1009 = vmatpush2.msra.mxu0 0.0
      %1010 = vmatprep.subr.mxu0 0.0
      %1011 = vmatpush2.msra.mxu0 0.0
      %1012 = vmatprep.subr.mxu0 0.0
      %1013 = vmatpush2.msra.mxu0 0.0
      %1014 = vmatprep.subr.mxu0 0.0
      %1015 = vmatpush2.msra.mxu0 0.0
      %1016 = vmatprep.subr.mxu0 0.0
      %1017 = vmatpush2.msra.mxu0 0.0
      %1018 = vmatprep.subr.mxu0 0.0
      %1019 = vmatpush2.msra.mxu0 0.0
      %1020 = vmatprep.subr.mxu0 0.0
      %1021 = vmatpush2.msra.mxu0 0.0
      %1022 = vmatprep.subr.mxu0 0.0
      %1023 = vmatpush2.msra.mxu0 0.0
      %1024 = vmatprep.subr.mxu0 0.0
      %1025 = vmatpush2.msra.mxu0 0.0
      %1026 = vmatprep.subr.mxu0 0.0
      %1027 = vmatpush2.msra.mxu0 0.0
      %1028 = vmatprep.subr.mxu0 0.0
      %1029 = vmatpush2.msra.mxu0 0.0
      %1030 = vmatprep.subr.mxu0 0.0
      %1031 = vmatpush2.msra.mxu0 0.0
      %1032 = vmatprep.subr.mxu0 0.0
      %1033 = vmatpush2.msra.mxu0 0.0
      %1034 = vmatprep.mubr.f32.mxu0 0.0
      %1035 = vmatmul.mubr.f32.gmra.mxu0 %v944
      %v1036 = vpop.f32.mrf.mxu0
      %v1037 = vadd.f32 0.0, %v1036
      %v1038 = vpop.f32.mrf.mxu0
      %1039 = vmatprep.mubr.f32.mxu0 0.0
      %1040 = vmatmul.mubr.f32.gmra.mxu0 %v947
      %v1041 = vpop.f32.mrf.mxu0
      %v1042 = vadd.f32 0.0, %v1041
      %v1043 = vpop.f32.mrf.mxu0
      %1044 = vmatprep.mubr.f32.mxu0 0.0
      %1045 = vmatmul.mubr.f32.gmra.mxu0 %v950
      %v1046 = vpop.f32.mrf.mxu0
      %v1047 = vadd.f32 0.0, %v1046
      %v1048 = vpop.f32.mrf.mxu0
      %1049 = vmatprep.mubr.f32.mxu0 0.0
      %1050 = vmatmul.mubr.f32.gmra.mxu0 %v953
      %v1051 = vpop.f32.mrf.mxu0
      %v1052 = vadd.f32 0.0, %v1051
      %v1053 = vpop.f32.mrf.mxu0
      %1054 = vmatprep.mubr.f32.mxu0 0.0
      %1055 = vmatmul.mubr.f32.gmra.mxu0 %v956
      %v1056 = vpop.f32.mrf.mxu0
      %v1057 = vadd.f32 0.0, %v1056
      %v1058 = vpop.f32.mrf.mxu0
      %1059 = vmatprep.mubr.f32.mxu0 0.0
      %1060 = vmatmul.mubr.f32.gmra.mxu0 %v959
      %v1061 = vpop.f32.mrf.mxu0
      %v1062 = vadd.f32 0.0, %v1061
      %v1063 = vpop.f32.mrf.mxu0
      %1064 = vmatprep.mubr.f32.mxu0 0.0
      %1065 = vmatmul.mubr.f32.gmra.mxu0 %v962
      %v1066 = vpop.f32.mrf.mxu0
      %v1067 = vadd.f32 0.0, %v1066
      %v1068 = vpop.f32.mrf.mxu0
      %1069 = vmatprep.mubr.f32.mxu0 0.0
      %1070 = vmatmul.mubr.f32.gmra.mxu0 %v965
      %v1071 = vpop.f32.mrf.mxu0
      %v1072 = vadd.f32 0.0, %v1071
      %v1073 = vpop.f32.mrf.mxu0
      %1074 = vdwg.mxu0
      %v1075 = vadd.f32 %v925, %v1037
      %v1076 = vadd.f32 %v926, %v1042
      %v1077 = vadd.f32 %v927, %v1047
      %v1078 = vadd.f32 %v928, %v1052
      %v1079 = vadd.f32 %v929, %v1057
      %v1080 = vadd.f32 %v930, %v1062
      %v1081 = vadd.f32 %v931, %v1067
      %v1082 = vadd.f32 %v932, %v1072
      %v1083 = vld [vmem:[#allocation2] sm:$0xff]
      %v1084 = vld [vmem:[#allocation2 + $0x10] sm:$0xff]
      %v1085 = vld [vmem:[#allocation2 + $0x20] sm:$0xff]
      %v1086 = vld [vmem:[#allocation2 + $0x30] sm:$0xff]
      %v1087 = vld [vmem:[#allocation2 + $0x40] sm:$0xff]
      %v1088 = vld [vmem:[#allocation2 + $0x50] sm:$0xff]
      %v1089 = vld [vmem:[#allocation2 + $0x60] sm:$0xff]
      %v1090 = vld [vmem:[#allocation2 + $0x70] sm:$0xff]
      %s1091 = scalar_lea.vmem %s448, 16
      %v1092 = vld [vmem:[%s1091] sm:$0xff]
      %v1094 = vsel %vm484, %v1083, 0
      %v1097 = vsel %vm484, %v1084, 0
      %v1100 = vsel %vm484, %v1085, 0
      %v1103 = vsel %vm484, %v1086, 0
      %v1106 = vsel %vm484, %v1087, 0
      %v1109 = vsel %vm484, %v1088, 0
      %v1112 = vsel %vm484, %v1089, 0
      %v1115 = vsel %vm484, %v1090, 0
      %1117 = vmatprep.subr.mxu0 0.0
      %1118 = vmatpush1.msra.mxu0 0.0
      %1119 = vmatprep.subr.mxu0 0.0
      %1120 = vmatpush1.msra.mxu0 0.0
      %1121 = vmatprep.subr.mxu0 0.0
      %1122 = vmatpush1.msra.mxu0 0.0
      %1123 = vmatprep.subr.mxu0 0.0
      %1124 = vmatpush1.msra.mxu0 0.0
      %1125 = vmatprep.subr.mxu0 0.0
      %1126 = vmatpush1.msra.mxu0 0.0
      %1127 = vmatprep.subr.mxu0 0.0
      %1128 = vmatpush1.msra.mxu0 0.0
      %1129 = vmatprep.subr.mxu0 0.0
      %1130 = vmatpush1.msra.mxu0 0.0
      %1131 = vmatprep.subr.mxu0 0.0
      %1132 = vmatpush1.msra.mxu0 0.0
      %1133 = vmatprep.subr.mxu0 0.0
      %1134 = vmatpush1.msra.mxu0 0.0
      %1135 = vmatprep.subr.mxu0 0.0
      %1136 = vmatpush1.msra.mxu0 0.0
      %1137 = vmatprep.subr.mxu0 0.0
      %1138 = vmatpush1.msra.mxu0 0.0
      %1139 = vmatprep.subr.mxu0 0.0
      %1140 = vmatpush1.msra.mxu0 0.0
      %1141 = vmatprep.subr.mxu0 0.0
      %1142 = vmatpush1.msra.mxu0 0.0
      %1143 = vmatprep.subr.mxu0 0.0
      %1144 = vmatpush1.msra.mxu0 0.0
      %1145 = vmatprep.subr.mxu0 0.0
      %1146 = vmatpush1.msra.mxu0 0.0
      %1147 = vmatprep.subr.mxu0 0.0
      %1148 = vmatpush1.msra.mxu0 %v1092
      %1149 = vmatprep.subr.mxu0 0.0
      %1150 = vmatpush2.msra.mxu0 0.0
      %1151 = vmatprep.subr.mxu0 0.0
      %1152 = vmatpush2.msra.mxu0 0.0
      %1153 = vmatprep.subr.mxu0 0.0
      %1154 = vmatpush2.msra.mxu0 0.0
      %1155 = vmatprep.subr.mxu0 0.0
      %1156 = vmatpush2.msra.mxu0 0.0
      %1157 = vmatprep.subr.mxu0 0.0
      %1158 = vmatpush2.msra.mxu0 0.0
      %1159 = vmatprep.subr.mxu0 0.0
      %1160 = vmatpush2.msra.mxu0 0.0
      %1161 = vmatprep.subr.mxu0 0.0
      %1162 = vmatpush2.msra.mxu0 0.0
      %1163 = vmatprep.subr.mxu0 0.0
      %1164 = vmatpush2.msra.mxu0 0.0
      %1165 = vmatprep.subr.mxu0 0.0
      %1166 = vmatpush2.msra.mxu0 0.0
      %1167 = vmatprep.subr.mxu0 0.0
      %1168 = vmatpush2.msra.mxu0 0.0
      %1169 = vmatprep.subr.mxu0 0.0
      %1170 = vmatpush2.msra.mxu0 0.0
      %1171 = vmatprep.subr.mxu0 0.0
      %1172 = vmatpush2.msra.mxu0 0.0
      %1173 = vmatprep.subr.mxu0 0.0
      %1174 = vmatpush2.msra.mxu0 0.0
      %1175 = vmatprep.subr.mxu0 0.0
      %1176 = vmatpush2.msra.mxu0 0.0
      %1177 = vmatprep.subr.mxu0 0.0
      %1178 = vmatpush2.msra.mxu0 0.0
      %1179 = vmatprep.subr.mxu0 0.0
      %1180 = vmatpush2.msra.mxu0 0.0
      %1181 = vmatprep.mubr.f32.mxu0 0.0
      %1182 = vmatmul.mubr.f32.gmra.mxu0 %v1094
      %v1183 = vpop.f32.mrf.mxu0
      %v1184 = vadd.f32 0.0, %v1183
      %v1185 = vpop.f32.mrf.mxu0
      %1186 = vmatprep.mubr.f32.mxu0 0.0
      %1187 = vmatmul.mubr.f32.gmra.mxu0 %v1097
      %v1188 = vpop.f32.mrf.mxu0
      %v1189 = vadd.f32 0.0, %v1188
      %v1190 = vpop.f32.mrf.mxu0
      %1191 = vmatprep.mubr.f32.mxu0 0.0
      %1192 = vmatmul.mubr.f32.gmra.mxu0 %v1100
      %v1193 = vpop.f32.mrf.mxu0
      %v1194 = vadd.f32 0.0, %v1193
      %v1195 = vpop.f32.mrf.mxu0
      %1196 = vmatprep.mubr.f32.mxu0 0.0
      %1197 = vmatmul.mubr.f32.gmra.mxu0 %v1103
      %v1198 = vpop.f32.mrf.mxu0
      %v1199 = vadd.f32 0.0, %v1198
      %v1200 = vpop.f32.mrf.mxu0
      %1201 = vmatprep.mubr.f32.mxu0 0.0
      %1202 = vmatmul.mubr.f32.gmra.mxu0 %v1106
      %v1203 = vpop.f32.mrf.mxu0
      %v1204 = vadd.f32 0.0, %v1203
      %v1205 = vpop.f32.mrf.mxu0
      %1206 = vmatprep.mubr.f32.mxu0 0.0
      %1207 = vmatmul.mubr.f32.gmra.mxu0 %v1109
      %v1208 = vpop.f32.mrf.mxu0
      %v1209 = vadd.f32 0.0, %v1208
      %v1210 = vpop.f32.mrf.mxu0
      %1211 = vmatprep.mubr.f32.mxu0 0.0
      %1212 = vmatmul.mubr.f32.gmra.mxu0 %v1112
      %v1213 = vpop.f32.mrf.mxu0
      %v1214 = vadd.f32 0.0, %v1213
      %v1215 = vpop.f32.mrf.mxu0
      %1216 = vmatprep.mubr.f32.mxu0 0.0
      %1217 = vmatmul.mubr.f32.gmra.mxu0 %v1115
      %v1218 = vpop.f32.mrf.mxu0
      %v1219 = vadd.f32 0.0, %v1218
      %v1220 = vpop.f32.mrf.mxu0
      %1221 = vdwg.mxu0
      %v1222 = vadd.f32 %v1075, %v1184
      %v1223 = vadd.f32 %v1076, %v1189
      %v1224 = vadd.f32 %v1077, %v1194
      %v1225 = vadd.f32 %v1078, %v1199
      %v1226 = vadd.f32 %v1079, %v1204
      %v1227 = vadd.f32 %v1080, %v1209
      %v1228 = vadd.f32 %v1081, %v1214
      %v1229 = vadd.f32 %v1082, %v1219
      %v1230 = vld [vmem:[#allocation2 + $0x1] sm:$0xff]
      %v1231 = vld [vmem:[#allocation2 + $0x11] sm:$0xff]
      %v1232 = vld [vmem:[#allocation2 + $0x21] sm:$0xff]
      %v1233 = vld [vmem:[#allocation2 + $0x31] sm:$0xff]
      %v1234 = vld [vmem:[#allocation2 + $0x41] sm:$0xff]
      %v1235 = vld [vmem:[#allocation2 + $0x51] sm:$0xff]
      %v1236 = vld [vmem:[#allocation2 + $0x61] sm:$0xff]
      %v1237 = vld [vmem:[#allocation2 + $0x71] sm:$0xff]
      %s1238 = scalar_lea.vmem %s452, 8
      %v1239 = vld [vmem:[%s1238] sm:$0xf]
      %v1241 = vsel %vm523, %v1230, 0
      %v1244 = vsel %vm523, %v1231, 0
      %v1247 = vsel %vm523, %v1232, 0
      %v1250 = vsel %vm523, %v1233, 0
      %v1253 = vsel %vm523, %v1234, 0
      %v1256 = vsel %vm523, %v1235, 0
      %v1259 = vsel %vm523, %v1236, 0
      %v1262 = vsel %vm523, %v1237, 0
      %v1265 = vsel %vm548, %v1239, 0
      %1267 = vmatprep.subr.mxu0 0.0
      %1268 = vmatpush1.msra.mxu0 0.0
      %1269 = vmatprep.subr.mxu0 0.0
      %1270 = vmatpush1.msra.mxu0 0.0
      %1271 = vmatprep.subr.mxu0 0.0
      %1272 = vmatpush1.msra.mxu0 0.0
      %1273 = vmatprep.subr.mxu0 0.0
      %1274 = vmatpush1.msra.mxu0 0.0
      %1275 = vmatprep.subr.mxu0 0.0
      %1276 = vmatpush1.msra.mxu0 0.0
      %1277 = vmatprep.subr.mxu0 0.0
      %1278 = vmatpush1.msra.mxu0 0.0
      %1279 = vmatprep.subr.mxu0 0.0
      %1280 = vmatpush1.msra.mxu0 0.0
      %1281 = vmatprep.subr.mxu0 0.0
      %1282 = vmatpush1.msra.mxu0 0.0
      %1283 = vmatprep.subr.mxu0 0.0
      %1284 = vmatpush1.msra.mxu0 0.0
      %1285 = vmatprep.subr.mxu0 0.0
      %1286 = vmatpush1.msra.mxu0 0.0
      %1287 = vmatprep.subr.mxu0 0.0
      %1288 = vmatpush1.msra.mxu0 0.0
      %1289 = vmatprep.subr.mxu0 0.0
      %1290 = vmatpush1.msra.mxu0 0.0
      %1291 = vmatprep.subr.mxu0 0.0
      %1292 = vmatpush1.msra.mxu0 0.0
      %1293 = vmatprep.subr.mxu0 0.0
      %1294 = vmatpush1.msra.mxu0 0.0
      %1295 = vmatprep.subr.mxu0 0.0
      %1296 = vmatpush1.msra.mxu0 0.0
      %1297 = vmatprep.subr.mxu0 0.0
      %1298 = vmatpush1.msra.mxu0 %v1265
      %1299 = vmatprep.subr.mxu0 0.0
      %1300 = vmatpush2.msra.mxu0 0.0
      %1301 = vmatprep.subr.mxu0 0.0
      %1302 = vmatpush2.msra.mxu0 0.0
      %1303 = vmatprep.subr.mxu0 0.0
      %1304 = vmatpush2.msra.mxu0 0.0
      %1305 = vmatprep.subr.mxu0 0.0
      %1306 = vmatpush2.msra.mxu0 0.0
      %1307 = vmatprep.subr.mxu0 0.0
      %1308 = vmatpush2.msra.mxu0 0.0
      %1309 = vmatprep.subr.mxu0 0.0
      %1310 = vmatpush2.msra.mxu0 0.0
      %1311 = vmatprep.subr.mxu0 0.0
      %1312 = vmatpush2.msra.mxu0 0.0
      %1313 = vmatprep.subr.mxu0 0.0
      %1314 = vmatpush2.msra.mxu0 0.0
      %1315 = vmatprep.subr.mxu0 0.0
      %1316 = vmatpush2.msra.mxu0 0.0
      %1317 = vmatprep.subr.mxu0 0.0
      %1318 = vmatpush2.msra.mxu0 0.0
      %1319 = vmatprep.subr.mxu0 0.0
      %1320 = vmatpush2.msra.mxu0 0.0
      %1321 = vmatprep.subr.mxu0 0.0
      %1322 = vmatpush2.msra.mxu0 0.0
      %1323 = vmatprep.subr.mxu0 0.0
      %1324 = vmatpush2.msra.mxu0 0.0
      %1325 = vmatprep.subr.mxu0 0.0
      %1326 = vmatpush2.msra.mxu0 0.0
      %1327 = vmatprep.subr.mxu0 0.0
      %1328 = vmatpush2.msra.mxu0 0.0
      %1329 = vmatprep.subr.mxu0 0.0
      %1330 = vmatpush2.msra.mxu0 0.0
      %1331 = vmatprep.mubr.f32.mxu0 0.0
      %1332 = vmatmul.mubr.f32.gmra.mxu0 %v1241
      %v1333 = vpop.f32.mrf.mxu0
      %v1334 = vadd.f32 0.0, %v1333
      %v1335 = vpop.f32.mrf.mxu0
      %1336 = vmatprep.mubr.f32.mxu0 0.0
      %1337 = vmatmul.mubr.f32.gmra.mxu0 %v1244
      %v1338 = vpop.f32.mrf.mxu0
      %v1339 = vadd.f32 0.0, %v1338
      %v1340 = vpop.f32.mrf.mxu0
      %1341 = vmatprep.mubr.f32.mxu0 0.0
      %1342 = vmatmul.mubr.f32.gmra.mxu0 %v1247
      %v1343 = vpop.f32.mrf.mxu0
      %v1344 = vadd.f32 0.0, %v1343
      %v1345 = vpop.f32.mrf.mxu0
      %1346 = vmatprep.mubr.f32.mxu0 0.0
      %1347 = vmatmul.mubr.f32.gmra.mxu0 %v1250
      %v1348 = vpop.f32.mrf.mxu0
      %v1349 = vadd.f32 0.0, %v1348
      %v1350 = vpop.f32.mrf.mxu0
      %1351 = vmatprep.mubr.f32.mxu0 0.0
      %1352 = vmatmul.mubr.f32.gmra.mxu0 %v1253
      %v1353 = vpop.f32.mrf.mxu0
      %v1354 = vadd.f32 0.0, %v1353
      %v1355 = vpop.f32.mrf.mxu0
      %1356 = vmatprep.mubr.f32.mxu0 0.0
      %1357 = vmatmul.mubr.f32.gmra.mxu0 %v1256
      %v1358 = vpop.f32.mrf.mxu0
      %v1359 = vadd.f32 0.0, %v1358
      %v1360 = vpop.f32.mrf.mxu0
      %1361 = vmatprep.mubr.f32.mxu0 0.0
      %1362 = vmatmul.mubr.f32.gmra.mxu0 %v1259
      %v1363 = vpop.f32.mrf.mxu0
      %v1364 = vadd.f32 0.0, %v1363
      %v1365 = vpop.f32.mrf.mxu0
      %1366 = vmatprep.mubr.f32.mxu0 0.0
      %1367 = vmatmul.mubr.f32.gmra.mxu0 %v1262
      %v1368 = vpop.f32.mrf.mxu0
      %v1369 = vadd.f32 0.0, %v1368
      %v1370 = vpop.f32.mrf.mxu0
      %1371 = vdwg.mxu0
      %v1372 = vadd.f32 %v1222, %v1334
      %v1373 = vadd.f32 %v1223, %v1339
      %v1374 = vadd.f32 %v1224, %v1344
      %v1375 = vadd.f32 %v1225, %v1349
      %v1376 = vadd.f32 %v1226, %v1354
      %v1377 = vadd.f32 %v1227, %v1359
      %v1378 = vadd.f32 %v1228, %v1364
      %v1379 = vadd.f32 %v1229, %v1369
      %v1380 = vld [vmem:[%s455] sm:$0x1]
      %v1382 = vlaneseq
      %v1383 = vshrl.u32 %v1382, 7
      %v1384 = vsub.s32 0, %v1383
      %v1385 = vrot.slane %v1380, %v1384
      %v1387 = vadd.f32 %v1372, %v1385
      %v1388 = vadd.f32 %v1373, %v1385
      %v1389 = vadd.f32 %v1374, %v1385
      %v1390 = vadd.f32 %v1375, %v1385
      %v1391 = vadd.f32 %v1376, %v1385
      %v1392 = vadd.f32 %v1377, %v1385
      %v1393 = vadd.f32 %v1378, %v1385
      %v1394 = vadd.f32 %v1379, %v1385
      %v1395 = vmax.f32 %v1387, 0.0
      %v1396 = vmax.f32 %v1388, 0.0
      %v1397 = vmax.f32 %v1389, 0.0
      %v1398 = vmax.f32 %v1390, 0.0
      %v1399 = vmax.f32 %v1391, 0.0
      %v1400 = vmax.f32 %v1392, 0.0
      %v1401 = vmax.f32 %v1393, 0.0
      %v1402 = vmax.f32 %v1394, 0.0
      %1403 = vst [vmem:[%s467] sm:$0xff] %v1395
      %1404 = vst [vmem:[%s467 + $0x8] sm:$0xff] %v1396
      %1405 = vst [vmem:[%s467 + $0x10] sm:$0xff] %v1397
      %1406 = vst [vmem:[%s467 + $0x18] sm:$0xff] %v1398
      %1407 = vst [vmem:[%s467 + $0x20] sm:$0xff] %v1399
      %1408 = vst [vmem:[%s467 + $0x28] sm:$0xff] %v1400
      %1409 = vst [vmem:[%s467 + $0x30] sm:$0xff] %v1401
      %1410 = vst [vmem:[%s467 + $0x38] sm:$0xff] %v1402
      %s1411 = smul.u32 8, %s24
      %p1412 = scmp.lt.s32.totalorder %s22, 1
      %s1413 = scalar_select %p1412, %s22, 1
      %p1414 = scmp.lt.s32.totalorder %s1411, 7
      %s1415 = scalar_select %p1414, %s1411, 7
      %p1416 = scmp.lt.s32.totalorder %s23, 0
      %s1417 = scalar_select %p1416, %s23, 0
      %s1418 = sadd.s32 %s1417, %s1415
      %s1419 = smul.addr %s1413, 8
      %s1420 = sadd.s32 %s1418, %s1419
      %s1421 = smul.addr %s1420, 8
      %s1422 = scalar_lea.vmem %s6, %s1421
      // Predicated region
      $region45: #{down_forward.1} parent=43 // pred_check
        %p1423 = pneg %p224
      $region46: #{down_forward.1} parent=43 // pred_check_branch
        %1425 = sbr.rel (%p1423) target = $region48
      $region47: #{down_forward.1} parent=43 // pred_region
        %s1426 = smul.u32 8, %s24
      $region48: #{down_forward.1} parent=43 // pred_fallthru
        _
    $region44: #{down_forward.1} parent=5 // pred_fallthru
      _
    %p1427 = scmp.le.s32.totalorder 2, %s12
    // Predicated region
    $region49: #{down_forward.1} parent=5 // pred_check
      %p1428 = pneg %p1427
    $region50: #{down_forward.1} parent=5 // pred_check_branch
      %1430 = sbr.rel (%p1428) target = $region52
    $region51: #{down_forward.1} parent=5 // pred_region
      %s1431 = ssub.s32 %s12, 2
      // Predicated region
      $region53: #{down_forward.1} parent=51 // pred_check
        %p1432 = pneg %p230
      $region54: #{down_forward.1} parent=51 // pred_check_branch
        %1434 = sbr.rel (%p1432) target = $region56
      $region55: #{down_forward.1} parent=51 // pred_region
        %s1435 = smul.u32 8, %s27
        %p1436 = scmp.lt.s32.totalorder %s25, 1
        %s1437 = scalar_select %p1436, %s25, 1
        %p1438 = scmp.lt.s32.totalorder %s1435, 7
        %s1439 = scalar_select %p1438, %s1435, 7
        %p1440 = scmp.lt.s32.totalorder %s26, 0
        %s1441 = scalar_select %p1440, %s26, 0
        %s1442 = sadd.s32 %s1441, %s1439
        %s1443 = smul.addr %s1437, 8
        %s1444 = sadd.s32 %s1442, %s1443
        %s1445 = smul.addr %s1444, 8
        %s1446 = scalar_lea.vmem %s6, %s1445
      $region56: #{down_forward.1} parent=51 // pred_fallthru
        _
    $region52: #{down_forward.1} parent=5 // pred_fallthru
      _
  $region6: #{down_forward.1} parent=0 // loop_footer
    %s16 = sadd.s32 1, %s12
  $region7: #{down_forward.1} parent=0 // loop_footer_branch
    %11 = sbr.rel target = $region3
  $region8: #{down_forward.1} parent=0 // loop_exit
    _

</llo_original>
